<compile_context>
chip_gen: v6e
topology: v6e:2x2x1
jax: 0.10.0
libtpu: 0.0.40
codegen_flags: <defaults>
</compile_context>

<pallas_src>
import math

import jax
import jax.numpy as jnp
from jax.experimental import pallas as pl
from jax.experimental.pallas import tpu as pltpu

N_HEAD = 2          # attention heads in the synthetic GPT-2-style backbone
LN_EPS = 1e-5


# ----------------------------- in-kernel helpers -----------------------------

def _layernorm(x, g, b, eps=LN_EPS):
    mu = jnp.mean(x, axis=-1, keepdims=True)
    var = jnp.mean(jnp.square(x - mu), axis=-1, keepdims=True)
    return (x - mu) * jax.lax.rsqrt(var + eps) * g + b


def _gelu(x):
    # GPT-2 "gelu_new" (tanh approximation), kept in f32
    c = 0.7978845608028654  # sqrt(2/pi)
    return 0.5 * x * (1.0 + jnp.tanh(c * (x + 0.044715 * x * x * x)))


def _kv_chunk(t, target=512):
    """Largest KV chunk <= target that divides t (static)."""
    if t <= target:
        return t
    for c in range(target, 0, -1):
        if t % c == 0:
            return c
    return t


def _causal_attention_head(q, k, v):
    """Flash-style causal attention for one head.

    q is pre-scaled by 1/sqrt(head_dim).  q, k, v: (B, T, hd) float32.
    Online softmax over KV chunks -> no (T, T) blow-up at large T.
    """
    b, t, hd = q.shape
    chunk = _kv_chunk(t)
    n_chunks = t // chunk

    q_bf = q.astype(jnp.bfloat16)
    qi = jax.lax.broadcasted_iota(jnp.int32, (t, chunk), 0)

    m = jnp.full((b, t, 1), -1e30, dtype=jnp.float32)
    l = jnp.zeros((b, t, 1), dtype=jnp.float32)
    acc = jnp.zeros((b, t, hd), dtype=jnp.float32)

    for c in range(n_chunks):
        ks = k[:, c * chunk:(c + 1) * chunk, :].astype(jnp.bfloat16)
        vs = v[:, c * chunk:(c + 1) * chunk, :].astype(jnp.bfloat16)
        s = jnp.einsum('bqd,bkd->bqk', q_bf, ks,
                       preferred_element_type=jnp.float32)
        ki = c * chunk + jax.lax.broadcasted_iota(jnp.int32, (t, chunk), 1)
        s = jnp.where((ki <= qi)[None, :, :], s, -1e30)

        m_new = jnp.maximum(m, jnp.max(s, axis=-1, keepdims=True))
        alpha = jnp.exp(m - m_new)
        p = jnp.exp(s - m_new)
        l = alpha * l + jnp.sum(p, axis=-1, keepdims=True)
        acc = alpha * acc + jnp.einsum('bqk,bkd->bqd',
                                       p.astype(jnp.bfloat16), vs,
                                       preferred_element_type=jnp.float32)
        m = m_new

    # divide on the EUP slot instead of the VPU
    return acc * pl.reciprocal(l, approx=True)


# ----------------------------- Pallas kernels --------------------------------

def stacked_block_kernel(x0_ref, ln1g_ref, ln1b_ref, wqkv_ref, bqkv_ref,
                         wproj_ref, bproj_ref, ln2g_ref, ln2b_ref,
                         wfc_ref, bfc_ref, wfc2_ref, bfc2_ref,
                         y_ref, acc_ref):
    """Grid = (batch_tile, layer).  acc_ref carries the activation across layers."""
    layer = pl.program_id(1)
    n_layer = pl.num_programs(1)

    @pl.when(layer == 0)
    def _():
        acc_ref[...] = x0_ref[...]

    x = acc_ref[...]                               # (tb, T, D) f32
    tb, T, D = x.shape
    hd = D // N_HEAD
    scale = 1.0 / math.sqrt(hd)

    # ---- causal multi-head self-attention (pre-LN) ----
    h = _layernorm(x, ln1g_ref[...], ln1b_ref[...]).astype(jnp.bfloat16)
    # three separate tile-aligned matmuls against wqkv[(3, D, D)]
    q = jnp.einsum('btd,de->bte', h, wqkv_ref[0],
                   preferred_element_type=jnp.float32) + bqkv_ref[0]
    k = jnp.einsum('btd,de->bte', h, wqkv_ref[1],
                   preferred_element_type=jnp.float32) + bqkv_ref[1]
    v = jnp.einsum('btd,de->bte', h, wqkv_ref[2],
                   preferred_element_type=jnp.float32) + bqkv_ref[2]

    ctx = []
    for hh in range(N_HEAD):                       # static unroll over heads
        sl = slice(hh * hd, (hh + 1) * hd)
        ctx.append(_causal_attention_head(q[:, :, sl] * scale,
                                          k[:, :, sl], v[:, :, sl]))
    ctx = jnp.concatenate(ctx, axis=-1).astype(jnp.bfloat16)

    attn = jnp.einsum('btd,de->bte', ctx, wproj_ref[...],
                      preferred_element_type=jnp.float32) + bproj_ref[...]
    x = x + attn

    # ---- GELU MLP (pre-LN) ----
    h2 = _layernorm(x, ln2g_ref[...], ln2b_ref[...]).astype(jnp.bfloat16)
    ff = jnp.einsum('btd,df->btf', h2, wfc_ref[...],
                    preferred_element_type=jnp.float32) + bfc_ref[...]
    ff = _gelu(ff).astype(jnp.bfloat16)
    ff = jnp.einsum('btf,fd->btd', ff, wfc2_ref[...],
                    preferred_element_type=jnp.float32) + bfc2_ref[...]
    x = x + ff

    acc_ref[...] = x                               # carry to next layer (VMEM only)

    @pl.when(layer == n_layer - 1)
    def _():
        y_ref[...] = x                             # single HBM writeback per batch tile


def reward_head_kernel(x_ref, g_ref, b_ref, w_ref, bias_ref, out_ref):
    """Final ln_f + reward head on the last-token hidden state only."""
    h = _layernorm(x_ref[...], g_ref[...], b_ref[...])       # (B, D) f32
    # lane-wide reduction instead of a degenerate (D, 1) matmul
    out_ref[...] = jnp.sum(h * w_ref[...], axis=-1, keepdims=True) + bias_ref[...]


# ----------------------------- wrappers ---------------------------------------

_WEIGHT_ORDER = ('ln1g', 'ln1b', 'wqkv', 'bqkv', 'wproj', 'bproj',
                 'ln2g', 'ln2b', 'wfc', 'bfc', 'wfc2', 'bfc2')


def run_transformer_stack(x, blocks, *, batch_tile=None):
    B, T, D = x.shape
    L = blocks['ln1g'].shape[0]
    D4 = 4 * D
    tb = B if batch_tile is None else batch_tile
    assert B % tb == 0
    grid = (B // tb, L)        # (parallel batch tiles, arbitrary layer carry)

    act_spec = pl.BlockSpec((tb, T, D), lambda b, l: (b, 0, 0))

    def weight_spec(arr):
        # leading (layer) axis squeezed out; Pallas double-buffers the next
        # layer's weight tile while the current layer computes.
        return pl.BlockSpec(
            (pl.Squeezed(),) + tuple(arr.shape[1:]),
            lambda b, l, _nd=arr.ndim: (l,) + (0,) * (_nd - 1))

    weights = [blocks[name] for name in _WEIGHT_ORDER]

    matmul_flops = 2 * B * T * (3 * D * D + D * D + D * D4 + D4 * D)
    attn_flops = 4 * B * T * T * D
    cost = pl.CostEstimate(
        flops=L * (matmul_flops + attn_flops),
        transcendentals=L * B * T * (N_HEAD * T + D4),
        bytes_accessed=L * 2 * (3 * D * D + D * D + 2 * D * D4)   # bf16 weights
                       + L * 4 * (10 * D + D4)                    # LN / bias params
                       + 2 * B * T * D * 4)                       # activation in/out

    return pl.pallas_call(
        stacked_block_kernel,
        out_shape=jax.ShapeDtypeStruct((B, T, D), jnp.float32),
        grid_spec=pltpu.PrefetchScalarGridSpec(
            num_scalar_prefetch=0,
            grid=grid,
            in_specs=[act_spec] + [weight_spec(w) for w in weights],
            out_specs=act_spec,
            scratch_shapes=[pltpu.VMEM((tb, T, D), jnp.float32)],
        ),
        compiler_params=pltpu.CompilerParams(
            dimension_semantics=("parallel", "arbitrary"),
            vmem_limit_bytes=64 * 1024 * 1024,
        ),
        cost_estimate=cost,
    )(x, *weights)


def run_reward_head(x_last, head):
    B, D = x_last.shape
    lnfg, lnfb, wh, bh = head
    cost = pl.CostEstimate(flops=10 * B * D, transcendentals=2 * B,
                           bytes_accessed=(B * D + 3 * D + B + 1) * 4)
    return pl.pallas_call(
        reward_head_kernel,
        out_shape=jax.ShapeDtypeStruct((B, 1), jnp.float32),
        grid_spec=pltpu.PrefetchScalarGridSpec(
            num_scalar_prefetch=0,
            grid=(1,),
            in_specs=[
                pl.BlockSpec((B, D), lambda i: (0, 0)),
                pl.BlockSpec((1, D), lambda i: (0, 0)),
                pl.BlockSpec((1, D), lambda i: (0, 0)),
                pl.BlockSpec((1, D), lambda i: (0, 0)),
                pl.BlockSpec((1, 1), lambda i: (0, 0)),
            ],
            out_specs=pl.BlockSpec((B, 1), lambda i: (0, 0)),
        ),
        compiler_params=pltpu.CompilerParams(
            dimension_semantics=("arbitrary",),
            vmem_limit_bytes=16 * 1024 * 1024,
        ),
        cost_estimate=cost,
    )(x_last, lnfg, lnfb, wh, bh)


def reward_model_forward(input_ids, params):
    """Equivalent of RewardModel.forward(input_ids) -> (B,) rewards."""
    B, T = input_ids.shape
    # Glue: embedding gather in plain JAX.
    x = params['wte'][input_ids] + params['wpe'][:T][None, :, :]
    x = x.astype(jnp.float32)
    x = run_transformer_stack(x, params['blocks'])          # whole backbone, 1 call
    last = x[:, T - 1, :]                                    # (B, D): only the last
    reward = run_reward_head(last, params['head'])           # token feeds the head
    return jnp.squeeze(reward, axis=-1)                      # (B,)


# ----------------------------- parameter init ---------------------------------

def init_params(key, vocab, max_pos, D, n_layer):
    def nrm(k, shape, dtype=jnp.float32):
        return (0.02 * jax.random.normal(k, shape, dtype=jnp.float32)).astype(dtype)

    k_wte, k_wpe, k_qkv, k_proj, k_fc, k_fc2, k_head = jax.random.split(key, 7)
    L, D4 = n_layer, 4 * D
    params = {
        'wte': nrm(k_wte, (vocab, D)),
        'wpe': nrm(k_wpe, (max_pos, D)),
        'blocks': {
            'ln1g':  jnp.ones((L, 1, D), jnp.float32),
            'ln1b':  jnp.zeros((L, 1, D), jnp.float32),
            # (L, 3, D, D): Q/K/V as three tile-aligned matmuls, streamed per layer.
            'wqkv':  nrm(k_qkv, (L, 3, D, D), jnp.bfloat16),
            'bqkv':  jnp.zeros((L, 3, 1, D), jnp.float32),
            'wproj': nrm(k_proj, (L, D, D), jnp.bfloat16),
            'bproj': jnp.zeros((L, 1, D), jnp.float32),
            'ln2g':  jnp.ones((L, 1, D), jnp.float32),
            'ln2b':  jnp.zeros((L, 1, D), jnp.float32),
            'wfc':   nrm(k_fc, (L, D, D4), jnp.bfloat16),
            'bfc':   jnp.zeros((L, 1, D4), jnp.float32),
            'wfc2':  nrm(k_fc2, (L, D4, D), jnp.bfloat16),
            'bfc2':  jnp.zeros((L, 1, D), jnp.float32),
        },
        'head': (
            jnp.ones((1, D), jnp.float32),                 # ln_f gamma
            jnp.zeros((1, D), jnp.float32),                # ln_f beta
            nrm(k_head, (1, D), jnp.float32),              # reward head weight row
            jnp.zeros((1, 1), jnp.float32),                # reward head bias
        ),
    }
    return params


# ----------------------------- main --------------------------------------------

if __name__ == "__main__":
    B, T, D = 2, 8, 32
    VOCAB, MAX_POS, N_LAYER = 64, 16, 2

    key = jax.random.PRNGKey(0)
    k_param, k_ids = jax.random.split(key)
    params = init_params(k_param, VOCAB, MAX_POS, D, N_LAYER)
    input_ids = jax.random.randint(k_ids, (B, T), 0, VOCAB, dtype=jnp.int32)

    fwd = jax.jit(reward_model_forward)
    reward = fwd(input_ids, params)
    jax.block_until_ready(reward)
    assert reward.shape == (B,) and reward.dtype == jnp.float32
    assert bool(jnp.all(jnp.isfinite(reward)))
    print("KERNEL_OK")
</pallas_src>

<mosaic_0001>
module attributes {stable_mosaic.version = 11 : i64} {
  func.func @reward_head_kernel(%arg0: i32, %arg1: memref<2x32xf32, #tpu.memory_space<vmem>>, %arg2: memref<1x32xf32, #tpu.memory_space<vmem>>, %arg3: memref<1x32xf32, #tpu.memory_space<vmem>>, %arg4: memref<1x32xf32, #tpu.memory_space<vmem>>, %arg5: memref<1x1xf32, #tpu.memory_space<vmem>>, %arg6: memref<2x1xf32, #tpu.memory_space<vmem>>) attributes {dimension_semantics = [#tpu.dimension_semantics<arbitrary>], iteration_bounds = array<i64: 1>, scalar_prefetch = 0 : i64, scratch_operands = 0 : i64, tpu.core_type = #tpu.core_type<tc>, window_params = [{pipeline_mode = #tpu.pipeline_mode<synchronous>, transform_indices = @transform_0, window_bounds = array<i64: 2, 32>}, {pipeline_mode = #tpu.pipeline_mode<synchronous>, transform_indices = @transform_1, window_bounds = array<i64: 1, 32>}, {pipeline_mode = #tpu.pipeline_mode<synchronous>, transform_indices = @transform_2, window_bounds = array<i64: 1, 32>}, {pipeline_mode = #tpu.pipeline_mode<synchronous>, transform_indices = @transform_3, window_bounds = array<i64: 1, 32>}, {pipeline_mode = #tpu.pipeline_mode<synchronous>, transform_indices = @transform_4, window_bounds = array<i64: 1, 1>}, {pipeline_mode = #tpu.pipeline_mode<synchronous>, transform_indices = @transform_5, window_bounds = array<i64: 2, 1>}]} {
    %c0 = arith.constant 0 : index
    %c0_0 = arith.constant 0 : index
    %0 = vector.load %arg1[%c0, %c0_0] : memref<2x32xf32, #tpu.memory_space<vmem>>, vector<2x32xf32>
    %c0_1 = arith.constant 0 : index
    %c0_2 = arith.constant 0 : index
    %1 = vector.load %arg2[%c0_1, %c0_2] : memref<1x32xf32, #tpu.memory_space<vmem>>, vector<1x32xf32>
    %c0_3 = arith.constant 0 : index
    %c0_4 = arith.constant 0 : index
    %2 = vector.load %arg3[%c0_3, %c0_4] : memref<1x32xf32, #tpu.memory_space<vmem>>, vector<1x32xf32>
    %cst = arith.constant dense<0.000000e+00> : vector<2xf32>
    %3 = vector.multi_reduction <add>, %0, %cst [1] : vector<2x32xf32> to vector<2xf32>
    %4 = vector.shape_cast %3 : vector<2xf32> to vector<2x1xf32>
    %cst_5 = arith.constant 3.200000e+01 : f32
    %5 = vector.broadcast %cst_5 : f32 to vector<2x1xf32>
    %6 = arith.divf %4, %5 : vector<2x1xf32>
    %7 = vector.broadcast %6 : vector<2x1xf32> to vector<2x32xf32>
    %8 = arith.subf %0, %7 : vector<2x32xf32>
    %9 = arith.mulf %8, %8 : vector<2x32xf32>
    %cst_6 = arith.constant dense<0.000000e+00> : vector<2xf32>
    %10 = vector.multi_reduction <add>, %9, %cst_6 [1] : vector<2x32xf32> to vector<2xf32>
    %11 = vector.shape_cast %10 : vector<2xf32> to vector<2x1xf32>
    %cst_7 = arith.constant 3.200000e+01 : f32
    %12 = vector.broadcast %cst_7 : f32 to vector<2x1xf32>
    %13 = arith.divf %11, %12 : vector<2x1xf32>
    %14 = vector.broadcast %6 : vector<2x1xf32> to vector<2x32xf32>
    %15 = arith.subf %0, %14 : vector<2x32xf32>
    %cst_8 = arith.constant 9.99999974E-6 : f32
    %16 = vector.broadcast %cst_8 : f32 to vector<2x1xf32>
    %17 = arith.addf %13, %16 : vector<2x1xf32>
    %18 = math.rsqrt %17 : vector<2x1xf32>
    %19 = vector.broadcast %18 : vector<2x1xf32> to vector<2x32xf32>
    %20 = arith.mulf %15, %19 : vector<2x32xf32>
    %21 = vector.broadcast %1 : vector<1x32xf32> to vector<2x32xf32>
    %22 = arith.mulf %20, %21 : vector<2x32xf32>
    %23 = vector.broadcast %2 : vector<1x32xf32> to vector<2x32xf32>
    %24 = arith.addf %22, %23 : vector<2x32xf32>
    %c0_9 = arith.constant 0 : index
    %c0_10 = arith.constant 0 : index
    %25 = vector.load %arg4[%c0_9, %c0_10] : memref<1x32xf32, #tpu.memory_space<vmem>>, vector<1x32xf32>
    %26 = vector.broadcast %25 : vector<1x32xf32> to vector<2x32xf32>
    %27 = arith.mulf %24, %26 : vector<2x32xf32>
    %cst_11 = arith.constant dense<0.000000e+00> : vector<2xf32>
    %28 = vector.multi_reduction <add>, %27, %cst_11 [1] : vector<2x32xf32> to vector<2xf32>
    %29 = vector.shape_cast %28 : vector<2xf32> to vector<2x1xf32>
    %c0_12 = arith.constant 0 : index
    %c0_13 = arith.constant 0 : index
    %30 = vector.load %arg5[%c0_12, %c0_13] : memref<1x1xf32, #tpu.memory_space<vmem>>, vector<1x1xf32>
    %31 = vector.broadcast %30 : vector<1x1xf32> to vector<2x1xf32>
    %32 = arith.addf %29, %31 : vector<2x1xf32>
    %c0_14 = arith.constant 0 : index
    %c0_15 = arith.constant 0 : index
    %33 = vector.load %arg6[%c0_14, %c0_15] : memref<2x1xf32, #tpu.memory_space<vmem>>, vector<2x1xf32>
    tpu.vector_store %arg6[%c0_14, %c0_15], %32 {strides = array<i32>} : memref<2x1xf32, #tpu.memory_space<vmem>>, vector<2x1xf32>,
    return
  }
  func.func @transform_0(%arg0: i32) -> (i32, i32) {
    %c0_i32 = arith.constant 0 : i32
    %c0_i32_0 = arith.constant 0 : i32
    %c0_i32_1 = arith.constant 0 : i32
    return %c0_i32, %c0_i32_0 : i32, i32
  }
  func.func @transform_1(%arg0: i32) -> (i32, i32) {
    %c0_i32 = arith.constant 0 : i32
    %c0_i32_0 = arith.constant 0 : i32
    %c0_i32_1 = arith.constant 0 : i32
    return %c0_i32, %c0_i32_0 : i32, i32
  }
  func.func @transform_2(%arg0: i32) -> (i32, i32) {
    %c0_i32 = arith.constant 0 : i32
    %c0_i32_0 = arith.constant 0 : i32
    %c0_i32_1 = arith.constant 0 : i32
    return %c0_i32, %c0_i32_0 : i32, i32
  }
  func.func @transform_3(%arg0: i32) -> (i32, i32) {
    %c0_i32 = arith.constant 0 : i32
    %c0_i32_0 = arith.constant 0 : i32
    %c0_i32_1 = arith.constant 0 : i32
    return %c0_i32, %c0_i32_0 : i32, i32
  }
  func.func @transform_4(%arg0: i32) -> (i32, i32) {
    %c0_i32 = arith.constant 0 : i32
    %c0_i32_0 = arith.constant 0 : i32
    %c0_i32_1 = arith.constant 0 : i32
    return %c0_i32, %c0_i32_0 : i32, i32
  }
  func.func @transform_5(%arg0: i32) -> (i32, i32) {
    %c0_i32 = arith.constant 0 : i32
    %c0_i32_0 = arith.constant 0 : i32
    %c0_i32_1 = arith.constant 0 : i32
    return %c0_i32, %c0_i32_0 : i32, i32
  }
}

module attributes {stable_mosaic.version = 11 : i64} {
  func.func @stacked_block_kernel(%arg0: i32, %arg1: i32, %arg2: memref<2x8x32xf32, #tpu.memory_space<vmem>>, %arg3: memref<1x1x32xf32, #tpu.memory_space<vmem>>, %arg4: memref<1x1x32xf32, #tpu.memory_space<vmem>>, %arg5: memref<1x3x32x32xbf16, #tpu.memory_space<vmem>>, %arg6: memref<1x3x1x32xf32, #tpu.memory_space<vmem>>, %arg7: memref<1x32x32xbf16, #tpu.memory_space<vmem>>, %arg8: memref<1x1x32xf32, #tpu.memory_space<vmem>>, %arg9: memref<1x1x32xf32, #tpu.memory_space<vmem>>, %arg10: memref<1x1x32xf32, #tpu.memory_space<vmem>>, %arg11: memref<1x32x128xbf16, #tpu.memory_space<vmem>>, %arg12: memref<1x1x128xf32, #tpu.memory_space<vmem>>, %arg13: memref<1x128x32xbf16, #tpu.memory_space<vmem>>, %arg14: memref<1x1x32xf32, #tpu.memory_space<vmem>>, %arg15: memref<2x8x32xf32, #tpu.memory_space<vmem>>, %arg16: memref<2x8x32xf32, #tpu.memory_space<vmem>>) attributes {dimension_semantics = [#tpu.dimension_semantics<parallel>, #tpu.dimension_semantics<arbitrary>], iteration_bounds = array<i64: 1, 2>, scalar_prefetch = 0 : i64, scratch_operands = 1 : i64, tpu.core_type = #tpu.core_type<tc>, window_params = [{transform_indices = @transform_0, window_bounds = array<i64: 2, 8, 32>}, {transform_indices = @transform_1, window_bounds = array<i64: 1, 1, 32>}, {transform_indices = @transform_2, window_bounds = array<i64: 1, 1, 32>}, {transform_indices = @transform_3, window_bounds = array<i64: 1, 3, 32, 32>}, {transform_indices = @transform_4, window_bounds = array<i64: 1, 3, 1, 32>}, {transform_indices = @transform_5, window_bounds = array<i64: 1, 32, 32>}, {transform_indices = @transform_6, window_bounds = array<i64: 1, 1, 32>}, {transform_indices = @transform_7, window_bounds = array<i64: 1, 1, 32>}, {transform_indices = @transform_8, window_bounds = array<i64: 1, 1, 32>}, {transform_indices = @transform_9, window_bounds = array<i64: 1, 32, 128>}, {transform_indices = @transform_10, window_bounds = array<i64: 1, 1, 128>}, {transform_indices = @transform_11, window_bounds = array<i64: 1, 128, 32>}, {transform_indices = @transform_12, window_bounds = array<i64: 1, 1, 32>}, {transform_indices = @transform_13, window_bounds = array<i64: 2, 8, 32>}]} {
    %c0_i32 = arith.constant 0 : i32
    %0 = arith.cmpi eq, %arg1, %c0_i32 : i32
    %1 = arith.extui %0 : i1 to i32
    %c0_i32_0 = arith.constant 0 : i32
    %2 = arith.cmpi ne, %1, %c0_i32_0 : i32
    scf.if %2 {
      %c0_98 = arith.constant 0 : index
      %c0_99 = arith.constant 0 : index
      %c0_100 = arith.constant 0 : index
      %216 = vector.load %arg2[%c0_98, %c0_99, %c0_100] : memref<2x8x32xf32, #tpu.memory_space<vmem>>, vector<2x8x32xf32>
      %c0_101 = arith.constant 0 : index
      %c0_102 = arith.constant 0 : index
      %c0_103 = arith.constant 0 : index
      %217 = vector.load %arg16[%c0_101, %c0_102, %c0_103] : memref<2x8x32xf32, #tpu.memory_space<vmem>>, vector<2x8x32xf32>
      tpu.vector_store %arg16[%c0_101, %c0_102, %c0_103], %216 {strides = array<i32>} : memref<2x8x32xf32, #tpu.memory_space<vmem>>, vector<2x8x32xf32>,
    } else {
    }
    %c0 = arith.constant 0 : index
    %c0_1 = arith.constant 0 : index
    %c0_2 = arith.constant 0 : index
    %3 = vector.load %arg16[%c0, %c0_1, %c0_2] : memref<2x8x32xf32, #tpu.memory_space<vmem>>, vector<2x8x32xf32>
    %c0_3 = arith.constant 0 : index
    %c0_4 = arith.constant 0 : index
    %c0_5 = arith.constant 0 : index
    %4 = vector.load %arg3[%c0_3, %c0_4, %c0_5] : memref<1x1x32xf32, #tpu.memory_space<vmem>>, vector<1x1x32xf32>
    %5 = vector.shape_cast %4 : vector<1x1x32xf32> to vector<1x32xf32>
    %c0_6 = arith.constant 0 : index
    %c0_7 = arith.constant 0 : index
    %c0_8 = arith.constant 0 : index
    %6 = vector.load %arg4[%c0_6, %c0_7, %c0_8] : memref<1x1x32xf32, #tpu.memory_space<vmem>>, vector<1x1x32xf32>
    %7 = vector.shape_cast %6 : vector<1x1x32xf32> to vector<1x32xf32>
    %cst = arith.constant dense<0.000000e+00> : vector<2x8xf32>
    %8 = vector.multi_reduction <add>, %3, %cst [2] : vector<2x8x32xf32> to vector<2x8xf32>
    %9 = vector.shape_cast %8 : vector<2x8xf32> to vector<2x8x1xf32>
    %cst_9 = arith.constant 3.200000e+01 : f32
    %10 = vector.broadcast %cst_9 : f32 to vector<2x8x1xf32>
    %11 = arith.divf %9, %10 : vector<2x8x1xf32>
    %12 = vector.broadcast %11 : vector<2x8x1xf32> to vector<2x8x32xf32>
    %13 = arith.subf %3, %12 : vector<2x8x32xf32>
    %14 = arith.mulf %13, %13 : vector<2x8x32xf32>
    %cst_10 = arith.constant dense<0.000000e+00> : vector<2x8xf32>
    %15 = vector.multi_reduction <add>, %14, %cst_10 [2] : vector<2x8x32xf32> to vector<2x8xf32>
    %16 = vector.shape_cast %15 : vector<2x8xf32> to vector<2x8x1xf32>
    %cst_11 = arith.constant 3.200000e+01 : f32
    %17 = vector.broadcast %cst_11 : f32 to vector<2x8x1xf32>
    %18 = arith.divf %16, %17 : vector<2x8x1xf32>
    %19 = vector.broadcast %11 : vector<2x8x1xf32> to vector<2x8x32xf32>
    %20 = arith.subf %3, %19 : vector<2x8x32xf32>
    %cst_12 = arith.constant 9.99999974E-6 : f32
    %21 = vector.broadcast %cst_12 : f32 to vector<2x8x1xf32>
    %22 = arith.addf %18, %21 : vector<2x8x1xf32>
    %23 = math.rsqrt %22 : vector<2x8x1xf32>
    %24 = vector.broadcast %23 : vector<2x8x1xf32> to vector<2x8x32xf32>
    %25 = arith.mulf %20, %24 : vector<2x8x32xf32>
    %26 = vector.shape_cast %5 : vector<1x32xf32> to vector<1x1x32xf32>
    %27 = vector.broadcast %26 : vector<1x1x32xf32> to vector<2x8x32xf32>
    %28 = arith.mulf %25, %27 : vector<2x8x32xf32>
    %29 = vector.shape_cast %7 : vector<1x32xf32> to vector<1x1x32xf32>
    %30 = vector.broadcast %29 : vector<1x1x32xf32> to vector<2x8x32xf32>
    %31 = arith.addf %28, %30 : vector<2x8x32xf32>
    %32 = arith.truncf %31 : vector<2x8x32xf32> to vector<2x8x32xbf16>
    %c0_13 = arith.constant 0 : index
    %c0_14 = arith.constant 0 : index
    %c0_15 = arith.constant 0 : index
    %c0_16 = arith.constant 0 : index
    %33 = vector.load %arg5[%c0_13, %c0_14, %c0_15, %c0_16] : memref<1x3x32x32xbf16, #tpu.memory_space<vmem>>, vector<1x1x32x32xbf16>
    %34 = vector.shape_cast %33 : vector<1x1x32x32xbf16> to vector<32x32xbf16>
    "tpu.trace_start"() <{level = 10 : i32, message = "btd,de->bte"}> : () -> ()
    %cst_17 = arith.constant dense<0.000000e+00> : vector<2x8x32xf32>
    %35 = tpu.matmul %32, %34, %cst_17 {dimension_numbers = #tpu.dot_dimension_numbers<[2], [0], [0, 1], [1], [0, 0, 0, 1, 1, 1], [], []>} : vector<2x8x32xbf16>, vector<32x32xbf16>, vector<2x8x32xf32> -> vector<2x8x32xf32>
    "tpu.trace_stop"() : () -> ()
    %c0_18 = arith.constant 0 : index
    %c0_19 = arith.constant 0 : index
    %c0_20 = arith.constant 0 : index
    %c0_21 = arith.constant 0 : index
    %36 = vector.load %arg6[%c0_18, %c0_19, %c0_20, %c0_21] : memref<1x3x1x32xf32, #tpu.memory_space<vmem>>, vector<1x1x1x32xf32>
    %37 = vector.shape_cast %36 : vector<1x1x1x32xf32> to vector<1x32xf32>
    %38 = vector.shape_cast %37 : vector<1x32xf32> to vector<1x1x32xf32>
    %39 = vector.broadcast %38 : vector<1x1x32xf32> to vector<2x8x32xf32>
    %40 = arith.addf %35, %39 : vector<2x8x32xf32>
    %c0_22 = arith.constant 0 : index
    %c1 = arith.constant 1 : index
    %c0_23 = arith.constant 0 : index
    %c0_24 = arith.constant 0 : index
    %41 = vector.load %arg5[%c0_22, %c1, %c0_23, %c0_24] : memref<1x3x32x32xbf16, #tpu.memory_space<vmem>>, vector<1x1x32x32xbf16>
    %42 = vector.shape_cast %41 : vector<1x1x32x32xbf16> to vector<32x32xbf16>
    "tpu.trace_start"() <{level = 10 : i32, message = "btd,de->bte"}> : () -> ()
    %cst_25 = arith.constant dense<0.000000e+00> : vector<2x8x32xf32>
    %43 = tpu.matmul %32, %42, %cst_25 {dimension_numbers = #tpu.dot_dimension_numbers<[2], [0], [0, 1], [1], [0, 0, 0, 1, 1, 1], [], []>} : vector<2x8x32xbf16>, vector<32x32xbf16>, vector<2x8x32xf32> -> vector<2x8x32xf32>
    "tpu.trace_stop"() : () -> ()
    %c0_26 = arith.constant 0 : index
    %c1_27 = arith.constant 1 : index
    %c0_28 = arith.constant 0 : index
    %c0_29 = arith.constant 0 : index
    %44 = vector.load %arg6[%c0_26, %c1_27, %c0_28, %c0_29] : memref<1x3x1x32xf32, #tpu.memory_space<vmem>>, vector<1x1x1x32xf32>
    %45 = vector.shape_cast %44 : vector<1x1x1x32xf32> to vector<1x32xf32>
    %46 = vector.shape_cast %45 : vector<1x32xf32> to vector<1x1x32xf32>
    %47 = vector.broadcast %46 : vector<1x1x32xf32> to vector<2x8x32xf32>
    %48 = arith.addf %43, %47 : vector<2x8x32xf32>
    %c0_30 = arith.constant 0 : index
    %c2 = arith.constant 2 : index
    %c0_31 = arith.constant 0 : index
    %c0_32 = arith.constant 0 : index
    %49 = vector.load %arg5[%c0_30, %c2, %c0_31, %c0_32] : memref<1x3x32x32xbf16, #tpu.memory_space<vmem>>, vector<1x1x32x32xbf16>
    %50 = vector.shape_cast %49 : vector<1x1x32x32xbf16> to vector<32x32xbf16>
    "tpu.trace_start"() <{level = 10 : i32, message = "btd,de->bte"}> : () -> ()
    %cst_33 = arith.constant dense<0.000000e+00> : vector<2x8x32xf32>
    %51 = tpu.matmul %32, %50, %cst_33 {dimension_numbers = #tpu.dot_dimension_numbers<[2], [0], [0, 1], [1], [0, 0, 0, 1, 1, 1], [], []>} : vector<2x8x32xbf16>, vector<32x32xbf16>, vector<2x8x32xf32> -> vector<2x8x32xf32>
    "tpu.trace_stop"() : () -> ()
    %c0_34 = arith.constant 0 : index
    %c2_35 = arith.constant 2 : index
    %c0_36 = arith.constant 0 : index
    %c0_37 = arith.constant 0 : index
    %52 = vector.load %arg6[%c0_34, %c2_35, %c0_36, %c0_37] : memref<1x3x1x32xf32, #tpu.memory_space<vmem>>, vector<1x1x1x32xf32>
    %53 = vector.shape_cast %52 : vector<1x1x1x32xf32> to vector<1x32xf32>
    %54 = vector.shape_cast %53 : vector<1x32xf32> to vector<1x1x32xf32>
    %55 = vector.broadcast %54 : vector<1x1x32xf32> to vector<2x8x32xf32>
    %56 = arith.addf %51, %55 : vector<2x8x32xf32>
    %57 = vector.extract_strided_slice %40 {offsets = [0, 0, 0], sizes = [2, 8, 16], strides = [1, 1, 1]} : vector<2x8x32xf32> to vector<2x8x16xf32>
    %cst_38 = arith.constant 2.500000e-01 : f32
    %58 = vector.broadcast %cst_38 : f32 to vector<2x8x16xf32>
    %59 = arith.mulf %57, %58 : vector<2x8x16xf32>
    %60 = vector.extract_strided_slice %48 {offsets = [0, 0, 0], sizes = [2, 8, 16], strides = [1, 1, 1]} : vector<2x8x32xf32> to vector<2x8x16xf32>
    %61 = vector.extract_strided_slice %56 {offsets = [0, 0, 0], sizes = [2, 8, 16], strides = [1, 1, 1]} : vector<2x8x32xf32> to vector<2x8x16xf32>
    %62 = arith.truncf %59 : vector<2x8x16xf32> to vector<2x8x16xbf16>
    %63 = tpu.iota {dimensions = array<i32: 0>} : vector<8x8xi32>
    %cst_39 = arith.constant -1.000000e+30 : f32
    %64 = vector.broadcast %cst_39 : f32 to vector<2x8x1xf32>
    %cst_40 = arith.constant 0.000000e+00 : f32
    %65 = vector.broadcast %cst_40 : f32 to vector<2x8x1xf32>
    %cst_41 = arith.constant 0.000000e+00 : f32
    %66 = vector.broadcast %cst_41 : f32 to vector<2x8x16xf32>
    %67 = arith.truncf %60 : vector<2x8x16xf32> to vector<2x8x16xbf16>
    %68 = arith.truncf %61 : vector<2x8x16xf32> to vector<2x8x16xbf16>
    "tpu.trace_start"() <{level = 10 : i32, message = "bqd,bkd->bqk"}> : () -> ()
    %cst_42 = arith.constant dense<0.000000e+00> : vector<2x8x8xf32>
    %69 = tpu.matmul %62, %67, %cst_42 {dimension_numbers = #tpu.dot_dimension_numbers<[2], [2], [1], [1], [0, 0, 0, 1, 1, 1], [0], [0]>} : vector<2x8x16xbf16>, vector<2x8x16xbf16>, vector<2x8x8xf32> -> vector<2x8x8xf32>
    "tpu.trace_stop"() : () -> ()
    %70 = tpu.iota {dimensions = array<i32: 1>} : vector<8x8xi32>
    %c0_i32_43 = arith.constant 0 : i32
    %71 = vector.broadcast %c0_i32_43 : i32 to vector<8x8xi32>
    %72 = arith.addi %71, %70 : vector<8x8xi32>
    %73 = arith.cmpi sle, %72, %63 : vector<8x8xi32>
    %74 = vector.shape_cast %73 : vector<8x8xi1> to vector<1x8x8xi1>
    %cst_44 = arith.constant -1.000000e+30 : f32
    %75 = vector.shape_cast %74 : vector<1x8x8xi1> to vector<1x8x8xi1>
    %76 = vector.broadcast %75 : vector<1x8x8xi1> to vector<2x8x8xi1>
    %77 = vector.broadcast %cst_44 : f32 to vector<2x8x8xf32>
    %78 = arith.select %76, %69, %77 : vector<2x8x8xi1>, vector<2x8x8xf32>
    %cst_45 = arith.constant dense<0xFF800000> : vector<2x8xf32>
    %79 = vector.multi_reduction <maximumf>, %78, %cst_45 [2] : vector<2x8x8xf32> to vector<2x8xf32>
    %80 = vector.shape_cast %79 : vector<2x8xf32> to vector<2x8x1xf32>
    %81 = arith.maximumf %64, %80 : vector<2x8x1xf32>
    %82 = arith.subf %64, %81 : vector<2x8x1xf32>
    %83 = math.exp %82 : vector<2x8x1xf32>
    %84 = vector.broadcast %81 : vector<2x8x1xf32> to vector<2x8x8xf32>
    %85 = arith.subf %78, %84 : vector<2x8x8xf32>
    %86 = math.exp %85 : vector<2x8x8xf32>
    %87 = arith.mulf %83, %65 : vector<2x8x1xf32>
    %cst_46 = arith.constant dense<0.000000e+00> : vector<2x8xf32>
    %88 = vector.multi_reduction <add>, %86, %cst_46 [2] : vector<2x8x8xf32> to vector<2x8xf32>
    %89 = vector.shape_cast %88 : vector<2x8xf32> to vector<2x8x1xf32>
    %90 = arith.addf %87, %89 : vector<2x8x1xf32>
    %91 = vector.broadcast %83 : vector<2x8x1xf32> to vector<2x8x16xf32>
    %92 = arith.mulf %91, %66 : vector<2x8x16xf32>
    %93 = arith.truncf %86 : vector<2x8x8xf32> to vector<2x8x8xbf16>
    "tpu.trace_start"() <{level = 10 : i32, message = "bqk,bkd->bqd"}> : () -> ()
    %cst_47 = arith.constant dense<0.000000e+00> : vector<2x8x16xf32>
    %94 = tpu.matmul %93, %68, %cst_47 {dimension_numbers = #tpu.dot_dimension_numbers<[2], [1], [1], [2], [0, 0, 0, 1, 1, 2], [0], [0]>} : vector<2x8x8xbf16>, vector<2x8x16xbf16>, vector<2x8x16xf32> -> vector<2x8x16xf32>
    "tpu.trace_stop"() : () -> ()
    %95 = arith.addf %92, %94 : vector<2x8x16xf32>
    %96 = tpu.reciprocal %90 {approx = true} : vector<2x8x1xf32> -> vector<2x8x1xf32>
    %97 = vector.broadcast %96 : vector<2x8x1xf32> to vector<2x8x16xf32>
    %98 = arith.mulf %95, %97 : vector<2x8x16xf32>
    %99 = vector.extract_strided_slice %40 {offsets = [0, 0, 16], sizes = [2, 8, 16], strides = [1, 1, 1]} : vector<2x8x32xf32> to vector<2x8x16xf32>
    %cst_48 = arith.constant 2.500000e-01 : f32
    %100 = vector.broadcast %cst_48 : f32 to vector<2x8x16xf32>
    %101 = arith.mulf %99, %100 : vector<2x8x16xf32>
    %102 = vector.extract_strided_slice %48 {offsets = [0, 0, 16], sizes = [2, 8, 16], strides = [1, 1, 1]} : vector<2x8x32xf32> to vector<2x8x16xf32>
    %103 = vector.extract_strided_slice %56 {offsets = [0, 0, 16], sizes = [2, 8, 16], strides = [1, 1, 1]} : vector<2x8x32xf32> to vector<2x8x16xf32>
    %104 = arith.truncf %101 : vector<2x8x16xf32> to vector<2x8x16xbf16>
    %105 = tpu.iota {dimensions = array<i32: 0>} : vector<8x8xi32>
    %cst_49 = arith.constant -1.000000e+30 : f32
    %106 = vector.broadcast %cst_49 : f32 to vector<2x8x1xf32>
    %cst_50 = arith.constant 0.000000e+00 : f32
    %107 = vector.broadcast %cst_50 : f32 to vector<2x8x1xf32>
    %cst_51 = arith.constant 0.000000e+00 : f32
    %108 = vector.broadcast %cst_51 : f32 to vector<2x8x16xf32>
    %109 = arith.truncf %102 : vector<2x8x16xf32> to vector<2x8x16xbf16>
    %110 = arith.truncf %103 : vector<2x8x16xf32> to vector<2x8x16xbf16>
    "tpu.trace_start"() <{level = 10 : i32, message = "bqd,bkd->bqk"}> : () -> ()
    %cst_52 = arith.constant dense<0.000000e+00> : vector<2x8x8xf32>
    %111 = tpu.matmul %104, %109, %cst_52 {dimension_numbers = #tpu.dot_dimension_numbers<[2], [2], [1], [1], [0, 0, 0, 1, 1, 1], [0], [0]>} : vector<2x8x16xbf16>, vector<2x8x16xbf16>, vector<2x8x8xf32> -> vector<2x8x8xf32>
    "tpu.trace_stop"() : () -> ()
    %112 = tpu.iota {dimensions = array<i32: 1>} : vector<8x8xi32>
    %c0_i32_53 = arith.constant 0 : i32
    %113 = vector.broadcast %c0_i32_53 : i32 to vector<8x8xi32>
    %114 = arith.addi %113, %112 : vector<8x8xi32>
    %115 = arith.cmpi sle, %114, %105 : vector<8x8xi32>
    %116 = vector.shape_cast %115 : vector<8x8xi1> to vector<1x8x8xi1>
    %cst_54 = arith.constant -1.000000e+30 : f32
    %117 = vector.shape_cast %116 : vector<1x8x8xi1> to vector<1x8x8xi1>
    %118 = vector.broadcast %117 : vector<1x8x8xi1> to vector<2x8x8xi1>
    %119 = vector.broadcast %cst_54 : f32 to vector<2x8x8xf32>
    %120 = arith.select %118, %111, %119 : vector<2x8x8xi1>, vector<2x8x8xf32>
    %cst_55 = arith.constant dense<0xFF800000> : vector<2x8xf32>
    %121 = vector.multi_reduction <maximumf>, %120, %cst_55 [2] : vector<2x8x8xf32> to vector<2x8xf32>
    %122 = vector.shape_cast %121 : vector<2x8xf32> to vector<2x8x1xf32>
    %123 = arith.maximumf %106, %122 : vector<2x8x1xf32>
    %124 = arith.subf %106, %123 : vector<2x8x1xf32>
    %125 = math.exp %124 : vector<2x8x1xf32>
    %126 = vector.broadcast %123 : vector<2x8x1xf32> to vector<2x8x8xf32>
    %127 = arith.subf %120, %126 : vector<2x8x8xf32>
    %128 = math.exp %127 : vector<2x8x8xf32>
    %129 = arith.mulf %125, %107 : vector<2x8x1xf32>
    %cst_56 = arith.constant dense<0.000000e+00> : vector<2x8xf32>
    %130 = vector.multi_reduction <add>, %128, %cst_56 [2] : vector<2x8x8xf32> to vector<2x8xf32>
    %131 = vector.shape_cast %130 : vector<2x8xf32> to vector<2x8x1xf32>
    %132 = arith.addf %129, %131 : vector<2x8x1xf32>
    %133 = vector.broadcast %125 : vector<2x8x1xf32> to vector<2x8x16xf32>
    %134 = arith.mulf %133, %108 : vector<2x8x16xf32>
    %135 = arith.truncf %128 : vector<2x8x8xf32> to vector<2x8x8xbf16>
    "tpu.trace_start"() <{level = 10 : i32, message = "bqk,bkd->bqd"}> : () -> ()
    %cst_57 = arith.constant dense<0.000000e+00> : vector<2x8x16xf32>
    %136 = tpu.matmul %135, %110, %cst_57 {dimension_numbers = #tpu.dot_dimension_numbers<[2], [1], [1], [2], [0, 0, 0, 1, 1, 2], [0], [0]>} : vector<2x8x8xbf16>, vector<2x8x16xbf16>, vector<2x8x16xf32> -> vector<2x8x16xf32>
    "tpu.trace_stop"() : () -> ()
    %137 = arith.addf %134, %136 : vector<2x8x16xf32>
    %138 = tpu.reciprocal %132 {approx = true} : vector<2x8x1xf32> -> vector<2x8x1xf32>
    %139 = vector.broadcast %138 : vector<2x8x1xf32> to vector<2x8x16xf32>
    %140 = arith.mulf %137, %139 : vector<2x8x16xf32>
    %141 = tpu.concatenate %98, %140 in 2 : vector<2x8x16xf32>, vector<2x8x16xf32> -> vector<2x8x32xf32>
    %142 = arith.truncf %141 : vector<2x8x32xf32> to vector<2x8x32xbf16>
    %c0_58 = arith.constant 0 : index
    %c0_59 = arith.constant 0 : index
    %c0_60 = arith.constant 0 : index
    %143 = vector.load %arg7[%c0_58, %c0_59, %c0_60] : memref<1x32x32xbf16, #tpu.memory_space<vmem>>, vector<1x32x32xbf16>
    %144 = vector.shape_cast %143 : vector<1x32x32xbf16> to vector<32x32xbf16>
    "tpu.trace_start"() <{level = 10 : i32, message = "btd,de->bte"}> : () -> ()
    %cst_61 = arith.constant dense<0.000000e+00> : vector<2x8x32xf32>
    %145 = tpu.matmul %142, %144, %cst_61 {dimension_numbers = #tpu.dot_dimension_numbers<[2], [0], [0, 1], [1], [0, 0, 0, 1, 1, 1], [], []>} : vector<2x8x32xbf16>, vector<32x32xbf16>, vector<2x8x32xf32> -> vector<2x8x32xf32>
    "tpu.trace_stop"() : () -> ()
    %c0_62 = arith.constant 0 : index
    %c0_63 = arith.constant 0 : index
    %c0_64 = arith.constant 0 : index
    %146 = vector.load %arg8[%c0_62, %c0_63, %c0_64] : memref<1x1x32xf32, #tpu.memory_space<vmem>>, vector<1x1x32xf32>
    %147 = vector.shape_cast %146 : vector<1x1x32xf32> to vector<1x32xf32>
    %148 = vector.shape_cast %147 : vector<1x32xf32> to vector<1x1x32xf32>
    %149 = vector.broadcast %148 : vector<1x1x32xf32> to vector<2x8x32xf32>
    %150 = arith.addf %145, %149 : vector<2x8x32xf32>
    %151 = arith.addf %3, %150 : vector<2x8x32xf32>
    %c0_65 = arith.constant 0 : index
    %c0_66 = arith.constant 0 : index
    %c0_67 = arith.constant 0 : index
    %152 = vector.load %arg9[%c0_65, %c0_66, %c0_67] : memref<1x1x32xf32, #tpu.memory_space<vmem>>, vector<1x1x32xf32>
    %153 = vector.shape_cast %152 : vector<1x1x32xf32> to vector<1x32xf32>
    %c0_68 = arith.constant 0 : index
    %c0_69 = arith.constant 0 : index
    %c0_70 = arith.constant 0 : index
    %154 = vector.load %arg10[%c0_68, %c0_69, %c0_70] : memref<1x1x32xf32, #tpu.memory_space<vmem>>, vector<1x1x32xf32>
    %155 = vector.shape_cast %154 : vector<1x1x32xf32> to vector<1x32xf32>
    %cst_71 = arith.constant dense<0.000000e+00> : vector<2x8xf32>
    %156 = vector.multi_reduction <add>, %151, %cst_71 [2] : vector<2x8x32xf32> to vector<2x8xf32>
    %157 = vector.shape_cast %156 : vector<2x8xf32> to vector<2x8x1xf32>
    %cst_72 = arith.constant 3.200000e+01 : f32
    %158 = vector.broadcast %cst_72 : f32 to vector<2x8x1xf32>
    %159 = arith.divf %157, %158 : vector<2x8x1xf32>
    %160 = vector.broadcast %159 : vector<2x8x1xf32> to vector<2x8x32xf32>
    %161 = arith.subf %151, %160 : vector<2x8x32xf32>
    %162 = arith.mulf %161, %161 : vector<2x8x32xf32>
    %cst_73 = arith.constant dense<0.000000e+00> : vector<2x8xf32>
    %163 = vector.multi_reduction <add>, %162, %cst_73 [2] : vector<2x8x32xf32> to vector<2x8xf32>
    %164 = vector.shape_cast %163 : vector<2x8xf32> to vector<2x8x1xf32>
    %cst_74 = arith.constant 3.200000e+01 : f32
    %165 = vector.broadcast %cst_74 : f32 to vector<2x8x1xf32>
    %166 = arith.divf %164, %165 : vector<2x8x1xf32>
    %167 = vector.broadcast %159 : vector<2x8x1xf32> to vector<2x8x32xf32>
    %168 = arith.subf %151, %167 : vector<2x8x32xf32>
    %cst_75 = arith.constant 9.99999974E-6 : f32
    %169 = vector.broadcast %cst_75 : f32 to vector<2x8x1xf32>
    %170 = arith.addf %166, %169 : vector<2x8x1xf32>
    %171 = math.rsqrt %170 : vector<2x8x1xf32>
    %172 = vector.broadcast %171 : vector<2x8x1xf32> to vector<2x8x32xf32>
    %173 = arith.mulf %168, %172 : vector<2x8x32xf32>
    %174 = vector.shape_cast %153 : vector<1x32xf32> to vector<1x1x32xf32>
    %175 = vector.broadcast %174 : vector<1x1x32xf32> to vector<2x8x32xf32>
    %176 = arith.mulf %173, %175 : vector<2x8x32xf32>
    %177 = vector.shape_cast %155 : vector<1x32xf32> to vector<1x1x32xf32>
    %178 = vector.broadcast %177 : vector<1x1x32xf32> to vector<2x8x32xf32>
    %179 = arith.addf %176, %178 : vector<2x8x32xf32>
    %180 = arith.truncf %179 : vector<2x8x32xf32> to vector<2x8x32xbf16>
    %c0_76 = arith.constant 0 : index
    %c0_77 = arith.constant 0 : index
    %c0_78 = arith.constant 0 : index
    %181 = vector.load %arg11[%c0_76, %c0_77, %c0_78] : memref<1x32x128xbf16, #tpu.memory_space<vmem>>, vector<1x32x128xbf16>
    %182 = vector.shape_cast %181 : vector<1x32x128xbf16> to vector<32x128xbf16>
    "tpu.trace_start"() <{level = 10 : i32, message = "btd,df->btf"}> : () -> ()
    %cst_79 = arith.constant dense<0.000000e+00> : vector<2x8x128xf32>
    %183 = tpu.matmul %180, %182, %cst_79 {dimension_numbers = #tpu.dot_dimension_numbers<[2], [0], [0, 1], [1], [0, 0, 0, 1, 1, 1], [], []>} : vector<2x8x32xbf16>, vector<32x128xbf16>, vector<2x8x128xf32> -> vector<2x8x128xf32>
    "tpu.trace_stop"() : () -> ()
    %c0_80 = arith.constant 0 : index
    %c0_81 = arith.constant 0 : index
    %c0_82 = arith.constant 0 : index
    %184 = vector.load %arg12[%c0_80, %c0_81, %c0_82] : memref<1x1x128xf32, #tpu.memory_space<vmem>>, vector<1x1x128xf32>
    %185 = vector.shape_cast %184 : vector<1x1x128xf32> to vector<1x128xf32>
    %186 = vector.shape_cast %185 : vector<1x128xf32> to vector<1x1x128xf32>
    %187 = vector.broadcast %186 : vector<1x1x128xf32> to vector<2x8x128xf32>
    %188 = arith.addf %183, %187 : vector<2x8x128xf32>
    %cst_83 = arith.constant 5.000000e-01 : f32
    %189 = vector.broadcast %cst_83 : f32 to vector<2x8x128xf32>
    %190 = arith.mulf %189, %188 : vector<2x8x128xf32>
    %cst_84 = arith.constant 4.471500e-02 : f32
    %191 = vector.broadcast %cst_84 : f32 to vector<2x8x128xf32>
    %192 = arith.mulf %191, %188 : vector<2x8x128xf32>
    %193 = arith.mulf %192, %188 : vector<2x8x128xf32>
    %194 = arith.mulf %193, %188 : vector<2x8x128xf32>
    %195 = arith.addf %188, %194 : vector<2x8x128xf32>
    %cst_85 = arith.constant 0.797884583 : f32
    %196 = vector.broadcast %cst_85 : f32 to vector<2x8x128xf32>
    %197 = arith.mulf %196, %195 : vector<2x8x128xf32>
    %198 = math.tanh %197 : vector<2x8x128xf32>
    %cst_86 = arith.constant 1.000000e+00 : f32
    %199 = vector.broadcast %cst_86 : f32 to vector<2x8x128xf32>
    %200 = arith.addf %199, %198 : vector<2x8x128xf32>
    %201 = arith.mulf %190, %200 : vector<2x8x128xf32>
    %202 = arith.truncf %201 : vector<2x8x128xf32> to vector<2x8x128xbf16>
    %c0_87 = arith.constant 0 : index
    %c0_88 = arith.constant 0 : index
    %c0_89 = arith.constant 0 : index
    %203 = vector.load %arg13[%c0_87, %c0_88, %c0_89] : memref<1x128x32xbf16, #tpu.memory_space<vmem>>, vector<1x128x32xbf16>
    %204 = vector.shape_cast %203 : vector<1x128x32xbf16> to vector<128x32xbf16>
    "tpu.trace_start"() <{level = 10 : i32, message = "btf,fd->btd"}> : () -> ()
    %cst_90 = arith.constant dense<0.000000e+00> : vector<2x8x32xf32>
    %205 = tpu.matmul %202, %204, %cst_90 {dimension_numbers = #tpu.dot_dimension_numbers<[2], [0], [0, 1], [1], [0, 0, 0, 1, 1, 1], [], []>} : vector<2x8x128xbf16>, vector<128x32xbf16>, vector<2x8x32xf32> -> vector<2x8x32xf32>
    "tpu.trace_stop"() : () -> ()
    %c0_91 = arith.constant 0 : index
    %c0_92 = arith.constant 0 : index
    %c0_93 = arith.constant 0 : index
    %206 = vector.load %arg14[%c0_91, %c0_92, %c0_93] : memref<1x1x32xf32, #tpu.memory_space<vmem>>, vector<1x1x32xf32>
    %207 = vector.shape_cast %206 : vector<1x1x32xf32> to vector<1x32xf32>
    %208 = vector.shape_cast %207 : vector<1x32xf32> to vector<1x1x32xf32>
    %209 = vector.broadcast %208 : vector<1x1x32xf32> to vector<2x8x32xf32>
    %210 = arith.addf %205, %209 : vector<2x8x32xf32>
    %211 = arith.addf %151, %210 : vector<2x8x32xf32>
    %c0_94 = arith.constant 0 : index
    %c0_95 = arith.constant 0 : index
    %c0_96 = arith.constant 0 : index
    %212 = vector.load %arg16[%c0_94, %c0_95, %c0_96] : memref<2x8x32xf32, #tpu.memory_space<vmem>>, vector<2x8x32xf32>
    tpu.vector_store %arg16[%c0_94, %c0_95, %c0_96], %211 {strides = array<i32>} : memref<2x8x32xf32, #tpu.memory_space<vmem>>, vector<2x8x32xf32>,
    %c1_i32 = arith.constant 1 : i32
    %213 = arith.cmpi eq, %arg1, %c1_i32 : i32
    %214 = arith.extui %213 : i1 to i32
    %c0_i32_97 = arith.constant 0 : i32
    %215 = arith.cmpi ne, %214, %c0_i32_97 : i32
    scf.if %215 {
      %c0_98 = arith.constant 0 : index
      %c0_99 = arith.constant 0 : index
      %c0_100 = arith.constant 0 : index
      %216 = vector.load %arg15[%c0_98, %c0_99, %c0_100] : memref<2x8x32xf32, #tpu.memory_space<vmem>>, vector<2x8x32xf32>
      tpu.vector_store %arg15[%c0_98, %c0_99, %c0_100], %211 {strides = array<i32>} : memref<2x8x32xf32, #tpu.memory_space<vmem>>, vector<2x8x32xf32>,
    } else {
    }
    return
  }
  func.func @transform_0(%arg0: i32, %arg1: i32) -> (i32, i32, i32) {
    %c0_i32 = arith.constant 0 : i32
    %c0_i32_0 = arith.constant 0 : i32
    %c0_i32_1 = arith.constant 0 : i32
    return %arg0, %c0_i32, %c0_i32_0 : i32, i32, i32
  }
  func.func @transform_1(%arg0: i32, %arg1: i32) -> (i32, i32, i32) {
    %c0_i32 = arith.constant 0 : i32
    %c0_i32_0 = arith.constant 0 : i32
    %c0_i32_1 = arith.constant 0 : i32
    return %arg1, %c0_i32, %c0_i32_0 : i32, i32, i32
  }
  func.func @transform_2(%arg0: i32, %arg1: i32) -> (i32, i32, i32) {
    %c0_i32 = arith.constant 0 : i32
    %c0_i32_0 = arith.constant 0 : i32
    %c0_i32_1 = arith.constant 0 : i32
    return %arg1, %c0_i32, %c0_i32_0 : i32, i32, i32
  }
  func.func @transform_3(%arg0: i32, %arg1: i32) -> (i32, i32, i32, i32) {
    %c0_i32 = arith.constant 0 : i32
    %c0_i32_0 = arith.constant 0 : i32
    %c0_i32_1 = arith.constant 0 : i32
    %c0_i32_2 = arith.constant 0 : i32
    return %arg1, %c0_i32, %c0_i32_0, %c0_i32_1 : i32, i32, i32, i32
  }
  func.func @transform_4(%arg0: i32, %arg1: i32) -> (i32, i32, i32, i32) {
    %c0_i32 = arith.constant 0 : i32
    %c0_i32_0 = arith.constant 0 : i32
    %c0_i32_1 = arith.constant 0 : i32
    %c0_i32_2 = arith.constant 0 : i32
    return %arg1, %c0_i32, %c0_i32_0, %c0_i32_1 : i32, i32, i32, i32
  }
  func.func @transform_5(%arg0: i32, %arg1: i32) -> (i32, i32, i32) {
    %c0_i32 = arith.constant 0 : i32
    %c0_i32_0 = arith.constant 0 : i32
    %c0_i32_1 = arith.constant 0 : i32
    return %arg1, %c0_i32, %c0_i32_0 : i32, i32, i32
  }
  func.func @transform_6(%arg0: i32, %arg1: i32) -> (i32, i32, i32) {
    %c0_i32 = arith.constant 0 : i32
    %c0_i32_0 = arith.constant 0 : i32
    %c0_i32_1 = arith.constant 0 : i32
    return %arg1, %c0_i32, %c0_i32_0 : i32, i32, i32
  }
  func.func @transform_7(%arg0: i32, %arg1: i32) -> (i32, i32, i32) {
    %c0_i32 = arith.constant 0 : i32
    %c0_i32_0 = arith.constant 0 : i32
    %c0_i32_1 = arith.constant 0 : i32
    return %arg1, %c0_i32, %c0_i32_0 : i32, i32, i32
  }
  func.func @transform_8(%arg0: i32, %arg1: i32) -> (i32, i32, i32) {
    %c0_i32 = arith.constant 0 : i32
    %c0_i32_0 = arith.constant 0 : i32
    %c0_i32_1 = arith.constant 0 : i32
    return %arg1, %c0_i32, %c0_i32_0 : i32, i32, i32
  }
  func.func @transform_9(%arg0: i32, %arg1: i32) -> (i32, i32, i32) {
    %c0_i32 = arith.constant 0 : i32
    %c0_i32_0 = arith.constant 0 : i32
    %c0_i32_1 = arith.constant 0 : i32
    return %arg1, %c0_i32, %c0_i32_0 : i32, i32, i32
  }
  func.func @transform_10(%arg0: i32, %arg1: i32) -> (i32, i32, i32) {
    %c0_i32 = arith.constant 0 : i32
    %c0_i32_0 = arith.constant 0 : i32
    %c0_i32_1 = arith.constant 0 : i32
    return %arg1, %c0_i32, %c0_i32_0 : i32, i32, i32
  }
  func.func @transform_11(%arg0: i32, %arg1: i32) -> (i32, i32, i32) {
    %c0_i32 = arith.constant 0 : i32
    %c0_i32_0 = arith.constant 0 : i32
    %c0_i32_1 = arith.constant 0 : i32
    return %arg1, %c0_i32, %c0_i32_0 : i32, i32, i32
  }
  func.func @transform_12(%arg0: i32, %arg1: i32) -> (i32, i32, i32) {
    %c0_i32 = arith.constant 0 : i32
    %c0_i32_0 = arith.constant 0 : i32
    %c0_i32_1 = arith.constant 0 : i32
    return %arg1, %c0_i32, %c0_i32_0 : i32, i32, i32
  }
  func.func @transform_13(%arg0: i32, %arg1: i32) -> (i32, i32, i32) {
    %c0_i32 = arith.constant 0 : i32
    %c0_i32_0 = arith.constant 0 : i32
    %c0_i32_1 = arith.constant 0 : i32
    return %arg0, %c0_i32, %c0_i32_0 : i32, i32, i32
  }
}

</mosaic_0001>

<llo_original>
// kernel: reward_model_forward.3
$region0: #{reward_model_forward.3}
  #allocation0 [shape = 'u32[]', space=smem, size = 0x4, offset = 0x4, fixed_abs, tag = 'smem constant byte address 0x4 - core index']
  #allocation1 [shape = 'u32[144,128]{1,0:T(1,128)}', space=vmem, size = 0x12000, scoped, tag = 'internal scratch']
  #allocation2 [shape = 'f32[1,1]{1,0:T(1,128)S(1)}', space=vmem, size = 0x200, scoped, tag = 'scoped memory for reward_model_forward.3']
  %s0 = inlined_call_operand.vmem [shape: f32[2,32], index: 0, kind: input, shape index: {}]
  %s1 = inlined_call_operand.vmem [shape: f32[1,32], index: 1, kind: input, shape index: {}]
  %s2 = inlined_call_operand.vmem [shape: f32[1,32], index: 2, kind: input, shape index: {}]
  %s3 = inlined_call_operand.vmem [shape: f32[1,32], index: 3, kind: input, shape index: {}]
  %s4 = inlined_call_operand.<no memory space> [shape: f32[1,1], index: 4, kind: input, shape index: {}]
  %s5 = inlined_call_operand.vmem [shape: f32[2,1], index: 5, kind: output, shape index: {}]
  %s6 = sld [smem:[#allocation0]]
  $region30: #{reward_model_forward.3} parent=0
    _
  %s8 = ssub.s32 1, %s6
  %s9 = scalar_select 0, %s8, %s6
  %v10 = vstv %s4
  %11 = vst [vmem:[#allocation2] sm:$0x1] %v10
  // Predicated region
  $region2: #{reward_model_forward.3} parent=0 // pred_check
    _
  $region3: #{reward_model_forward.3} parent=0 // pred_check_branch
    %13 = sbr.rel (0) target = $region5
  $region4: #{reward_model_forward.3} parent=0 // pred_region
    _
  $region5: #{reward_model_forward.3} parent=0 // pred_fallthru
    _
  // Predicated region
  $region6: #{reward_model_forward.3} parent=0 // pred_check
    _
  $region7: #{reward_model_forward.3} parent=0 // pred_check_branch
    %15 = sbr.rel (0) target = $region9
  $region8: #{reward_model_forward.3} parent=0 // pred_region
    _
  $region9: #{reward_model_forward.3} parent=0 // pred_fallthru
    _
  // Predicated region
  $region10: #{reward_model_forward.3} parent=0 // pred_check
    _
  $region11: #{reward_model_forward.3} parent=0 // pred_check_branch
    %17 = sbr.rel (0) target = $region13
  $region12: #{reward_model_forward.3} parent=0 // pred_region
    _
  $region13: #{reward_model_forward.3} parent=0 // pred_fallthru
    _
  // Predicated region
  $region14: #{reward_model_forward.3} parent=0 // pred_check
    _
  $region15: #{reward_model_forward.3} parent=0 // pred_check_branch
    %19 = sbr.rel (0) target = $region17
  $region16: #{reward_model_forward.3} parent=0 // pred_region
    _
  $region17: #{reward_model_forward.3} parent=0 // pred_fallthru
    _
  // Predicated region
  $region18: #{reward_model_forward.3} parent=0 // pred_check
    _
  $region19: #{reward_model_forward.3} parent=0 // pred_check_branch
    %21 = sbr.rel (0) target = $region21
  $region20: #{reward_model_forward.3} parent=0 // pred_region
    _
  $region21: #{reward_model_forward.3} parent=0 // pred_fallthru
    _
  %v22 = vld [vmem:[%s0] sm:$0x3]
  %v23 = vld [vmem:[%s1] sm:$0x1]
  %v24 = vld [vmem:[%s2] sm:$0x1]
  %vm25 = vcmask 254976
  %v26 = vsel %vm25, %v22, 0.0
  %27 = vadd.xlane.f32.xlu0 %v26
  %v28 = vpop.xlane.xlu0 %27
  %v29 = vrcp.pop 32.0
  %v30 = vmul.f32 %v28, %v29
  %v31 = vsub.f32 %v22, %v30
  %v32 = vmul.f32 %v31, %v31
  %v33 = vsel %vm25, %v32, 0.0
  %34 = vadd.xlane.f32.xlu0 %v33
  %v35 = vpop.xlane.xlu0 %34
  %v36 = vmul.f32 %v35, %v29
  %v37 = vadd.f32 %v36, 1e-05
  %v38 = vrsqrt.pop %v37
  %v39 = vmul.f32 %v31, %v38
  %v41 = vlaneseq
  %v42 = vshrl.u32 %v41, 7
  %v43 = vsub.s32 0, %v42
  %v44 = vrot.slane %v23, %v43
  %v46 = vmul.f32 %v39, %v44
  %v48 = vlaneseq
  %v49 = vshrl.u32 %v48, 7
  %v50 = vsub.s32 0, %v49
  %v51 = vrot.slane %v24, %v50
  %v53 = vadd.f32 %v46, %v51
  %v54 = vld [vmem:[%s3] sm:$0x1]
  %v56 = vlaneseq
  %v57 = vshrl.u32 %v56, 7
  %v58 = vsub.s32 0, %v57
  %v59 = vrot.slane %v54, %v58
  %v61 = vmul.f32 %v53, %v59
  %v62 = vsel %vm25, %v61, 0.0
  %63 = vadd.xlane.f32.xlu0 %v62
  %v64 = vpop.xlane.xlu0 %63
  %v65 = vld [vmem:[#allocation2] sm:$0x1]
  %v67 = vlaneseq
  %v68 = vshrl.u32 %v67, 7
  %v69 = vsub.s32 0, %v68
  %v70 = vrot.slane %v65, %v69
  %v72 = vadd.f32 %v64, %v70
  %vm73 = vcmask 1024
  %74 = vst.msk [vmem:[%s5] sm:$0x3] %vm73, %v72
  // Predicated region
  $region22: #{reward_model_forward.3} parent=0 // pred_check
    _
  $region23: #{reward_model_forward.3} parent=0 // pred_check_branch
    %76 = sbr.rel (0) target = $region25
  $region24: #{reward_model_forward.3} parent=0 // pred_region
    _
  $region25: #{reward_model_forward.3} parent=0 // pred_fallthru
    _
  // Predicated region
  $region26: #{reward_model_forward.3} parent=0 // pred_check
    _
  $region27: #{reward_model_forward.3} parent=0 // pred_check_branch
    %78 = sbr.rel (0) target = $region29
  $region28: #{reward_model_forward.3} parent=0 // pred_region
    _
  $region29: #{reward_model_forward.3} parent=0 // pred_fallthru
    _

// kernel: reward_model_forward.2
$region0: #{reward_model_forward.2}
  #allocation0 [shape = 'u32[]', space=smem, size = 0x4, offset = 0x4, fixed_abs, tag = 'smem constant byte address 0x4 - core index']
  #allocation1 [shape = 'u32[144,128]{1,0:T(1,128)}', space=vmem, size = 0x12000, scoped, tag = 'internal scratch']
  #allocation2 [shape = 'f32[2,8,32]{2,1,0:T(8,128)}', space=vmem, size = 0x2000, scoped, tag = 'scratch operand']
  %s0 = inlined_call_operand.vmem [shape: f32[2,8,32], index: 0, kind: input, shape index: {}]
  %s1 = inlined_call_operand.vmem [shape: f32[2,1,32], index: 1, kind: input, shape index: {}]
  %s2 = inlined_call_operand.vmem [shape: f32[2,1,32], index: 2, kind: input, shape index: {}]
  %s3 = inlined_call_operand.vmem [shape: bf16[2,3,32,32], index: 3, kind: input, shape index: {}]
  %s4 = inlined_call_operand.vmem [shape: f32[2,3,1,32], index: 4, kind: input, shape index: {}]
  %s5 = inlined_call_operand.vmem [shape: bf16[2,32,32], index: 5, kind: input, shape index: {}]
  %s6 = inlined_call_operand.vmem [shape: f32[2,1,32], index: 6, kind: input, shape index: {}]
  %s7 = inlined_call_operand.vmem [shape: f32[2,1,32], index: 7, kind: input, shape index: {}]
  %s8 = inlined_call_operand.vmem [shape: f32[2,1,32], index: 8, kind: input, shape index: {}]
  %s9 = inlined_call_operand.vmem [shape: bf16[2,32,128], index: 9, kind: input, shape index: {}]
  %s10 = inlined_call_operand.vmem [shape: f32[2,1,128], index: 10, kind: input, shape index: {}]
  %s11 = inlined_call_operand.vmem [shape: bf16[2,128,32], index: 11, kind: input, shape index: {}]
  %s12 = inlined_call_operand.vmem [shape: f32[2,1,32], index: 12, kind: input, shape index: {}]
  %s13 = inlined_call_operand.vmem [shape: f32[2,8,32], index: 13, kind: output, shape index: {}]
  %s14 = sld [smem:[#allocation0]]
  $region93: #{reward_model_forward.2} parent=0
    _
  %s16 = ssub.s32 1, %s14
  %s17 = scalar_select 0, %s16, %s14
  loop: start=0, step=1, limit=4
  $region2: #{reward_model_forward.2} parent=0 // loop_pre_header
    _
  $region3: #{reward_model_forward.2} parent=0 // loop_header
    %s19 = sphi 0, %s23
    %p20 = scmp.ge.s32.totalorder %s19, 4
    %s26 = sphi 0, %s38
    %s27 = sphi 0, %s34
    %s28 = sphi 0, %s26
    %s29 = sphi 0, %s27
    %s30 = sphi 0, %s28
    %s31 = sphi 0, %s29
    %s41 = sphi 0, %s43
    %s44 = sphi 0, %s41
    %s45 = sphi 0, %s44
    %s61 = sphi 0, %s45
    %s67 = sphi 0, %s69
    %s70 = sphi 0, %s67
    %s71 = sphi 0, %s70
    %s87 = sphi 0, %s71
    %s93 = sphi 0, %s95
    %s96 = sphi 0, %s93
    %s97 = sphi 0, %s96
    %s113 = sphi 0, %s97
    %s119 = sphi 0, %s121
    %s122 = sphi 0, %s119
    %s123 = sphi 0, %s122
    %s139 = sphi 0, %s123
    %s145 = sphi 0, %s147
    %s148 = sphi 0, %s145
    %s149 = sphi 0, %s148
    %s165 = sphi 0, %s149
    %s171 = sphi 0, %s173
    %s174 = sphi 0, %s171
    %s175 = sphi 0, %s174
    %s191 = sphi 0, %s175
    %s197 = sphi 0, %s199
    %s200 = sphi 0, %s197
    %s201 = sphi 0, %s200
    %s217 = sphi 0, %s201
    %s223 = sphi 0, %s225
    %s226 = sphi 0, %s223
    %s227 = sphi 0, %s226
    %s243 = sphi 0, %s227
    %s249 = sphi 0, %s251
    %s252 = sphi 0, %s249
    %s253 = sphi 0, %s252
    %s269 = sphi 0, %s253
    %s275 = sphi 0, %s277
    %s278 = sphi 0, %s275
    %s279 = sphi 0, %s278
    %s295 = sphi 0, %s279
    %s301 = sphi 0, %s303
    %s304 = sphi 0, %s301
    %s305 = sphi 0, %s304
    %s321 = sphi 0, %s305
    %s327 = sphi 0, %s329
    %s330 = sphi 0, %s327
    %s331 = sphi 0, %s330
    %s347 = sphi 0, %s331
    %s353 = sphi 0, %s355
    %s356 = sphi 0, %s353
    %s357 = sphi 0, %s356
    %s373 = sphi 0, %s357
    %s379 = sphi 0, %s381
    %s382 = sphi 0, %s379
    %s383 = sphi 0, %s382
    %s399 = sphi 0, %s383
  $region4: #{reward_model_forward.2} parent=0 // loop_header_branch
    %22 = sbr.rel (%p20) target = $region8
  $region5: #{reward_model_forward.2} parent=0 // loop_body
    %s24 = ssub.s32 %s19, 1
    %s25 = ssub.s32 %s19, 2
    %s32 = sadd.s32 1, %s27
    %p33 = scmp.ge.s32.totalorder %s32, 2
    %s34 = scalar_select %p33, 0, %s32
    %s35 = sadd.s32 1, %s26
    %s36 = scalar_select %p33, %s35, %s26
    %p37 = scmp.ge.s32.totalorder %s36, 1
    %s38 = scalar_select %p37, 0, %s36
    %s39 = ssub.s32 %s26, %s38
    %p40 = scmp.eq.s32.totalorder %s39, 0
    %s42 = sadd.s32 %s41, 1
    %s43 = scalar_select %p40, %s41, %s42
    %p46 = pneg %p40
    %p47 = scmp.eq.s32.totalorder %s19, 1
    %p48 = por %p46, %p47
    %p49 = scmp.ne.s32.totalorder %s41, %s44
    %p50 = scmp.eq.s32.totalorder %s19, 0
    %p51 = por %p49, %p50
    %p52 = scmp.ne.s32.totalorder %s41, %s44
    %p53 = scmp.eq.s32.totalorder %s24, 1
    %p54 = por %p52, %p53
    %p55 = scmp.ne.s32.totalorder %s44, %s45
    %p56 = scmp.eq.s32.totalorder %s24, 0
    %p57 = por %p55, %p56
    %p58 = scmp.ne.s32.totalorder %s44, %s45
    %p59 = scmp.eq.s32.totalorder %s25, 1
    %p60 = por %p58, %p59
    %p62 = scmp.ne.s32.totalorder %s45, %s61
    %p63 = scmp.eq.s32.totalorder %s25, 0
    %p64 = por %p62, %p63
    %s65 = ssub.s32 %s27, %s34
    %p66 = scmp.eq.s32.totalorder %s65, 0
    %s68 = sadd.s32 %s67, 1
    %s69 = scalar_select %p66, %s67, %s68
    %p72 = pneg %p66
    %p73 = scmp.eq.s32.totalorder %s19, 1
    %p74 = por %p72, %p73
    %p75 = scmp.ne.s32.totalorder %s67, %s70
    %p76 = scmp.eq.s32.totalorder %s19, 0
    %p77 = por %p75, %p76
    %p78 = scmp.ne.s32.totalorder %s67, %s70
    %p79 = scmp.eq.s32.totalorder %s24, 1
    %p80 = por %p78, %p79
    %p81 = scmp.ne.s32.totalorder %s70, %s71
    %p82 = scmp.eq.s32.totalorder %s24, 0
    %p83 = por %p81, %p82
    %p84 = scmp.ne.s32.totalorder %s70, %s71
    %p85 = scmp.eq.s32.totalorder %s25, 1
    %p86 = por %p84, %p85
    %p88 = scmp.ne.s32.totalorder %s71, %s87
    %p89 = scmp.eq.s32.totalorder %s25, 0
    %p90 = por %p88, %p89
    %s91 = ssub.s32 %s27, %s34
    %p92 = scmp.eq.s32.totalorder %s91, 0
    %s94 = sadd.s32 %s93, 1
    %s95 = scalar_select %p92, %s93, %s94
    %p98 = pneg %p92
    %p99 = scmp.eq.s32.totalorder %s19, 1
    %p100 = por %p98, %p99
    %p101 = scmp.ne.s32.totalorder %s93, %s96
    %p102 = scmp.eq.s32.totalorder %s19, 0
    %p103 = por %p101, %p102
    %p104 = scmp.ne.s32.totalorder %s93, %s96
    %p105 = scmp.eq.s32.totalorder %s24, 1
    %p106 = por %p104, %p105
    %p107 = scmp.ne.s32.totalorder %s96, %s97
    %p108 = scmp.eq.s32.totalorder %s24, 0
    %p109 = por %p107, %p108
    %p110 = scmp.ne.s32.totalorder %s96, %s97
    %p111 = scmp.eq.s32.totalorder %s25, 1
    %p112 = por %p110, %p111
    %p114 = scmp.ne.s32.totalorder %s97, %s113
    %p115 = scmp.eq.s32.totalorder %s25, 0
    %p116 = por %p114, %p115
    %s117 = ssub.s32 %s27, %s34
    %p118 = scmp.eq.s32.totalorder %s117, 0
    %s120 = sadd.s32 %s119, 1
    %s121 = scalar_select %p118, %s119, %s120
    %p124 = pneg %p118
    %p125 = scmp.eq.s32.totalorder %s19, 1
    %p126 = por %p124, %p125
    %p127 = scmp.ne.s32.totalorder %s119, %s122
    %p128 = scmp.eq.s32.totalorder %s19, 0
    %p129 = por %p127, %p128
    %p130 = scmp.ne.s32.totalorder %s119, %s122
    %p131 = scmp.eq.s32.totalorder %s24, 1
    %p132 = por %p130, %p131
    %p133 = scmp.ne.s32.totalorder %s122, %s123
    %p134 = scmp.eq.s32.totalorder %s24, 0
    %p135 = por %p133, %p134
    %p136 = scmp.ne.s32.totalorder %s122, %s123
    %p137 = scmp.eq.s32.totalorder %s25, 1
    %p138 = por %p136, %p137
    %p140 = scmp.ne.s32.totalorder %s123, %s139
    %p141 = scmp.eq.s32.totalorder %s25, 0
    %p142 = por %p140, %p141
    %s143 = ssub.s32 %s27, %s34
    %p144 = scmp.eq.s32.totalorder %s143, 0
    %s146 = sadd.s32 %s145, 1
    %s147 = scalar_select %p144, %s145, %s146
    %p150 = pneg %p144
    %p151 = scmp.eq.s32.totalorder %s19, 1
    %p152 = por %p150, %p151
    %p153 = scmp.ne.s32.totalorder %s145, %s148
    %p154 = scmp.eq.s32.totalorder %s19, 0
    %p155 = por %p153, %p154
    %p156 = scmp.ne.s32.totalorder %s145, %s148
    %p157 = scmp.eq.s32.totalorder %s24, 1
    %p158 = por %p156, %p157
    %p159 = scmp.ne.s32.totalorder %s148, %s149
    %p160 = scmp.eq.s32.totalorder %s24, 0
    %p161 = por %p159, %p160
    %p162 = scmp.ne.s32.totalorder %s148, %s149
    %p163 = scmp.eq.s32.totalorder %s25, 1
    %p164 = por %p162, %p163
    %p166 = scmp.ne.s32.totalorder %s149, %s165
    %p167 = scmp.eq.s32.totalorder %s25, 0
    %p168 = por %p166, %p167
    %s169 = ssub.s32 %s27, %s34
    %p170 = scmp.eq.s32.totalorder %s169, 0
    %s172 = sadd.s32 %s171, 1
    %s173 = scalar_select %p170, %s171, %s172
    %p176 = pneg %p170
    %p177 = scmp.eq.s32.totalorder %s19, 1
    %p178 = por %p176, %p177
    %p179 = scmp.ne.s32.totalorder %s171, %s174
    %p180 = scmp.eq.s32.totalorder %s19, 0
    %p181 = por %p179, %p180
    %p182 = scmp.ne.s32.totalorder %s171, %s174
    %p183 = scmp.eq.s32.totalorder %s24, 1
    %p184 = por %p182, %p183
    %p185 = scmp.ne.s32.totalorder %s174, %s175
    %p186 = scmp.eq.s32.totalorder %s24, 0
    %p187 = por %p185, %p186
    %p188 = scmp.ne.s32.totalorder %s174, %s175
    %p189 = scmp.eq.s32.totalorder %s25, 1
    %p190 = por %p188, %p189
    %p192 = scmp.ne.s32.totalorder %s175, %s191
    %p193 = scmp.eq.s32.totalorder %s25, 0
    %p194 = por %p192, %p193
    %s195 = ssub.s32 %s27, %s34
    %p196 = scmp.eq.s32.totalorder %s195, 0
    %s198 = sadd.s32 %s197, 1
    %s199 = scalar_select %p196, %s197, %s198
    %p202 = pneg %p196
    %p203 = scmp.eq.s32.totalorder %s19, 1
    %p204 = por %p202, %p203
    %p205 = scmp.ne.s32.totalorder %s197, %s200
    %p206 = scmp.eq.s32.totalorder %s19, 0
    %p207 = por %p205, %p206
    %p208 = scmp.ne.s32.totalorder %s197, %s200
    %p209 = scmp.eq.s32.totalorder %s24, 1
    %p210 = por %p208, %p209
    %p211 = scmp.ne.s32.totalorder %s200, %s201
    %p212 = scmp.eq.s32.totalorder %s24, 0
    %p213 = por %p211, %p212
    %p214 = scmp.ne.s32.totalorder %s200, %s201
    %p215 = scmp.eq.s32.totalorder %s25, 1
    %p216 = por %p214, %p215
    %p218 = scmp.ne.s32.totalorder %s201, %s217
    %p219 = scmp.eq.s32.totalorder %s25, 0
    %p220 = por %p218, %p219
    %s221 = ssub.s32 %s27, %s34
    %p222 = scmp.eq.s32.totalorder %s221, 0
    %s224 = sadd.s32 %s223, 1
    %s225 = scalar_select %p222, %s223, %s224
    %p228 = pneg %p222
    %p229 = scmp.eq.s32.totalorder %s19, 1
    %p230 = por %p228, %p229
    %p231 = scmp.ne.s32.totalorder %s223, %s226
    %p232 = scmp.eq.s32.totalorder %s19, 0
    %p233 = por %p231, %p232
    %p234 = scmp.ne.s32.totalorder %s223, %s226
    %p235 = scmp.eq.s32.totalorder %s24, 1
    %p236 = por %p234, %p235
    %p237 = scmp.ne.s32.totalorder %s226, %s227
    %p238 = scmp.eq.s32.totalorder %s24, 0
    %p239 = por %p237, %p238
    %p240 = scmp.ne.s32.totalorder %s226, %s227
    %p241 = scmp.eq.s32.totalorder %s25, 1
    %p242 = por %p240, %p241
    %p244 = scmp.ne.s32.totalorder %s227, %s243
    %p245 = scmp.eq.s32.totalorder %s25, 0
    %p246 = por %p244, %p245
    %s247 = ssub.s32 %s27, %s34
    %p248 = scmp.eq.s32.totalorder %s247, 0
    %s250 = sadd.s32 %s249, 1
    %s251 = scalar_select %p248, %s249, %s250
    %p254 = pneg %p248
    %p255 = scmp.eq.s32.totalorder %s19, 1
    %p256 = por %p254, %p255
    %p257 = scmp.ne.s32.totalorder %s249, %s252
    %p258 = scmp.eq.s32.totalorder %s19, 0
    %p259 = por %p257, %p258
    %p260 = scmp.ne.s32.totalorder %s249, %s252
    %p261 = scmp.eq.s32.totalorder %s24, 1
    %p262 = por %p260, %p261
    %p263 = scmp.ne.s32.totalorder %s252, %s253
    %p264 = scmp.eq.s32.totalorder %s24, 0
    %p265 = por %p263, %p264
    %p266 = scmp.ne.s32.totalorder %s252, %s253
    %p267 = scmp.eq.s32.totalorder %s25, 1
    %p268 = por %p266, %p267
    %p270 = scmp.ne.s32.totalorder %s253, %s269
    %p271 = scmp.eq.s32.totalorder %s25, 0
    %p272 = por %p270, %p271
    %s273 = ssub.s32 %s27, %s34
    %p274 = scmp.eq.s32.totalorder %s273, 0
    %s276 = sadd.s32 %s275, 1
    %s277 = scalar_select %p274, %s275, %s276
    %p280 = pneg %p274
    %p281 = scmp.eq.s32.totalorder %s19, 1
    %p282 = por %p280, %p281
    %p283 = scmp.ne.s32.totalorder %s275, %s278
    %p284 = scmp.eq.s32.totalorder %s19, 0
    %p285 = por %p283, %p284
    %p286 = scmp.ne.s32.totalorder %s275, %s278
    %p287 = scmp.eq.s32.totalorder %s24, 1
    %p288 = por %p286, %p287
    %p289 = scmp.ne.s32.totalorder %s278, %s279
    %p290 = scmp.eq.s32.totalorder %s24, 0
    %p291 = por %p289, %p290
    %p292 = scmp.ne.s32.totalorder %s278, %s279
    %p293 = scmp.eq.s32.totalorder %s25, 1
    %p294 = por %p292, %p293
    %p296 = scmp.ne.s32.totalorder %s279, %s295
    %p297 = scmp.eq.s32.totalorder %s25, 0
    %p298 = por %p296, %p297
    %s299 = ssub.s32 %s27, %s34
    %p300 = scmp.eq.s32.totalorder %s299, 0
    %s302 = sadd.s32 %s301, 1
    %s303 = scalar_select %p300, %s301, %s302
    %p306 = pneg %p300
    %p307 = scmp.eq.s32.totalorder %s19, 1
    %p308 = por %p306, %p307
    %p309 = scmp.ne.s32.totalorder %s301, %s304
    %p310 = scmp.eq.s32.totalorder %s19, 0
    %p311 = por %p309, %p310
    %p312 = scmp.ne.s32.totalorder %s301, %s304
    %p313 = scmp.eq.s32.totalorder %s24, 1
    %p314 = por %p312, %p313
    %p315 = scmp.ne.s32.totalorder %s304, %s305
    %p316 = scmp.eq.s32.totalorder %s24, 0
    %p317 = por %p315, %p316
    %p318 = scmp.ne.s32.totalorder %s304, %s305
    %p319 = scmp.eq.s32.totalorder %s25, 1
    %p320 = por %p318, %p319
    %p322 = scmp.ne.s32.totalorder %s305, %s321
    %p323 = scmp.eq.s32.totalorder %s25, 0
    %p324 = por %p322, %p323
    %s325 = ssub.s32 %s27, %s34
    %p326 = scmp.eq.s32.totalorder %s325, 0
    %s328 = sadd.s32 %s327, 1
    %s329 = scalar_select %p326, %s327, %s328
    %p332 = pneg %p326
    %p333 = scmp.eq.s32.totalorder %s19, 1
    %p334 = por %p332, %p333
    %p335 = scmp.ne.s32.totalorder %s327, %s330
    %p336 = scmp.eq.s32.totalorder %s19, 0
    %p337 = por %p335, %p336
    %p338 = scmp.ne.s32.totalorder %s327, %s330
    %p339 = scmp.eq.s32.totalorder %s24, 1
    %p340 = por %p338, %p339
    %p341 = scmp.ne.s32.totalorder %s330, %s331
    %p342 = scmp.eq.s32.totalorder %s24, 0
    %p343 = por %p341, %p342
    %p344 = scmp.ne.s32.totalorder %s330, %s331
    %p345 = scmp.eq.s32.totalorder %s25, 1
    %p346 = por %p344, %p345
    %p348 = scmp.ne.s32.totalorder %s331, %s347
    %p349 = scmp.eq.s32.totalorder %s25, 0
    %p350 = por %p348, %p349
    %s351 = ssub.s32 %s27, %s34
    %p352 = scmp.eq.s32.totalorder %s351, 0
    %s354 = sadd.s32 %s353, 1
    %s355 = scalar_select %p352, %s353, %s354
    %p358 = pneg %p352
    %p359 = scmp.eq.s32.totalorder %s19, 1
    %p360 = por %p358, %p359
    %p361 = scmp.ne.s32.totalorder %s353, %s356
    %p362 = scmp.eq.s32.totalorder %s19, 0
    %p363 = por %p361, %p362
    %p364 = scmp.ne.s32.totalorder %s353, %s356
    %p365 = scmp.eq.s32.totalorder %s24, 1
    %p366 = por %p364, %p365
    %p367 = scmp.ne.s32.totalorder %s356, %s357
    %p368 = scmp.eq.s32.totalorder %s24, 0
    %p369 = por %p367, %p368
    %p370 = scmp.ne.s32.totalorder %s356, %s357
    %p371 = scmp.eq.s32.totalorder %s25, 1
    %p372 = por %p370, %p371
    %p374 = scmp.ne.s32.totalorder %s357, %s373
    %p375 = scmp.eq.s32.totalorder %s25, 0
    %p376 = por %p374, %p375
    %s377 = ssub.s32 %s26, %s38
    %p378 = scmp.eq.s32.totalorder %s377, 0
    %s380 = sadd.s32 %s379, 1
    %s381 = scalar_select %p378, %s379, %s380
    %p384 = pneg %p378
    %p385 = scmp.eq.s32.totalorder %s19, 1
    %p386 = por %p384, %p385
    %p387 = scmp.ne.s32.totalorder %s379, %s382
    %p388 = scmp.eq.s32.totalorder %s19, 0
    %p389 = por %p387, %p388
    %p390 = scmp.ne.s32.totalorder %s379, %s382
    %p391 = scmp.eq.s32.totalorder %s24, 1
    %p392 = por %p390, %p391
    %p393 = scmp.ne.s32.totalorder %s382, %s383
    %p394 = scmp.eq.s32.totalorder %s24, 0
    %p395 = por %p393, %p394
    %p396 = scmp.ne.s32.totalorder %s382, %s383
    %p397 = scmp.eq.s32.totalorder %s25, 1
    %p398 = por %p396, %p397
    %p400 = scmp.ne.s32.totalorder %s383, %s399
    %p401 = scmp.eq.s32.totalorder %s25, 0
    %p402 = por %p400, %p401
    %p403 = scmp.le.s32.totalorder 1, %s19
    %p404 = scmp.lt.s32.totalorder %s19, 3
    %p405 = pnand %p403, %p404
    %p406 = pneg %p405
    // Predicated region
    $region9: #{reward_model_forward.2} parent=5 // pred_check
      _
    $region10: #{reward_model_forward.2} parent=5 // pred_check_branch
      %408 = sbr.rel (%p405) target = $region12
    $region11: #{reward_model_forward.2} parent=5 // pred_region
      %s409 = ssub.s32 %s19, 1
      // Predicated region
      $region13: #{reward_model_forward.2} parent=11 // pred_check
        %p410 = pneg %p57
      $region14: #{reward_model_forward.2} parent=11 // pred_check_branch
        %412 = sbr.rel (%p410) target = $region16
      $region15: #{reward_model_forward.2} parent=11 // pred_region
        %s413 = smul.u32 2, %s28
        %p414 = scmp.lt.s32.totalorder %s413, 1
        %s415 = scalar_select %p414, %s413, 1
        %s416 = smul.addr %s415, 8
        %s417 = scalar_lea.vmem %s0, %s416
        %s418 = smul.u32 2, %s28
      $region16: #{reward_model_forward.2} parent=11 // pred_fallthru
        _
    $region12: #{reward_model_forward.2} parent=5 // pred_fallthru
      _
    %p419 = scmp.lt.s32.totalorder %s19, 2
    // Predicated region
    $region17: #{reward_model_forward.2} parent=5 // pred_check
      %p420 = pneg %p419
    $region18: #{reward_model_forward.2} parent=5 // pred_check_branch
      %422 = sbr.rel (%p420) target = $region20
    $region19: #{reward_model_forward.2} parent=5 // pred_region
      // Predicated region
      $region21: #{reward_model_forward.2} parent=19 // pred_check
        %p423 = pneg %p77
      $region22: #{reward_model_forward.2} parent=19 // pred_check_branch
        %425 = sbr.rel (%p423) target = $region24
      $region23: #{reward_model_forward.2} parent=19 // pred_region
        %p426 = scmp.lt.s32.totalorder %s27, 1
        %s427 = scalar_select %p426, %s27, 1
        %s428 = scalar_lea.vmem %s1, %s427
      $region24: #{reward_model_forward.2} parent=19 // pred_fallthru
        _
      // Predicated region
      $region25: #{reward_model_forward.2} parent=19 // pred_check
        %p429 = pneg %p103
      $region26: #{reward_model_forward.2} parent=19 // pred_check_branch
        %431 = sbr.rel (%p429) target = $region28
      $region27: #{reward_model_forward.2} parent=19 // pred_region
        %p432 = scmp.lt.s32.totalorder %s27, 1
        %s433 = scalar_select %p432, %s27, 1
        %s434 = scalar_lea.vmem %s2, %s433
      $region28: #{reward_model_forward.2} parent=19 // pred_fallthru
        _
      // Predicated region
      $region29: #{reward_model_forward.2} parent=19 // pred_check
        %p435 = pneg %p129
      $region30: #{reward_model_forward.2} parent=19 // pred_check_branch
        %437 = sbr.rel (%p435) target = $region32
      $region31: #{reward_model_forward.2} parent=19 // pred_region
        %p438 = scmp.lt.s32.totalorder %s27, 1
        %s439 = scalar_select %p438, %s27, 1
        %s440 = smul.addr %s439, 12
        %s441 = smul.addr %s440, 4
        %s442 = scalar_lea.vmem %s3, %s441
      $region32: #{reward_model_forward.2} parent=19 // pred_fallthru
        _
      // Predicated region
      $region33: #{reward_model_forward.2} parent=19 // pred_check
        %p443 = pneg %p155
      $region34: #{reward_model_forward.2} parent=19 // pred_check_branch
        %445 = sbr.rel (%p443) target = $region36
      $region35: #{reward_model_forward.2} parent=19 // pred_region
        %p446 = scmp.lt.s32.totalorder %s27, 1
        %s447 = scalar_select %p446, %s27, 1
        %s448 = smul.addr %s447, 3
        %s449 = scalar_lea.vmem %s4, %s448
      $region36: #{reward_model_forward.2} parent=19 // pred_fallthru
        _
      // Predicated region
      $region37: #{reward_model_forward.2} parent=19 // pred_check
        %p450 = pneg %p181
      $region38: #{reward_model_forward.2} parent=19 // pred_check_branch
        %452 = sbr.rel (%p450) target = $region40
      $region39: #{reward_model_forward.2} parent=19 // pred_region
        %p453 = scmp.lt.s32.totalorder %s27, 1
        %s454 = scalar_select %p453, %s27, 1
        %s455 = smul.addr %s454, 4
        %s456 = smul.addr %s455, 4
        %s457 = scalar_lea.vmem %s5, %s456
      $region40: #{reward_model_forward.2} parent=19 // pred_fallthru
        _
      // Predicated region
      $region41: #{reward_model_forward.2} parent=19 // pred_check
        %p458 = pneg %p207
      $region42: #{reward_model_forward.2} parent=19 // pred_check_branch
        %460 = sbr.rel (%p458) target = $region44
      $region43: #{reward_model_forward.2} parent=19 // pred_region
        %p461 = scmp.lt.s32.totalorder %s27, 1
        %s462 = scalar_select %p461, %s27, 1
        %s463 = scalar_lea.vmem %s6, %s462
      $region44: #{reward_model_forward.2} parent=19 // pred_fallthru
        _
      // Predicated region
      $region45: #{reward_model_forward.2} parent=19 // pred_check
        %p464 = pneg %p233
      $region46: #{reward_model_forward.2} parent=19 // pred_check_branch
        %466 = sbr.rel (%p464) target = $region48
      $region47: #{reward_model_forward.2} parent=19 // pred_region
        %p467 = scmp.lt.s32.totalorder %s27, 1
        %s468 = scalar_select %p467, %s27, 1
        %s469 = scalar_lea.vmem %s7, %s468
      $region48: #{reward_model_forward.2} parent=19 // pred_fallthru
        _
      // Predicated region
      $region49: #{reward_model_forward.2} parent=19 // pred_check
        %p470 = pneg %p259
      $region50: #{reward_model_forward.2} parent=19 // pred_check_branch
        %472 = sbr.rel (%p470) target = $region52
      $region51: #{reward_model_forward.2} parent=19 // pred_region
        %p473 = scmp.lt.s32.totalorder %s27, 1
        %s474 = scalar_select %p473, %s27, 1
        %s475 = scalar_lea.vmem %s8, %s474
      $region52: #{reward_model_forward.2} parent=19 // pred_fallthru
        _
      // Predicated region
      $region53: #{reward_model_forward.2} parent=19 // pred_check
        %p476 = pneg %p285
      $region54: #{reward_model_forward.2} parent=19 // pred_check_branch
        %478 = sbr.rel (%p476) target = $region56
      $region55: #{reward_model_forward.2} parent=19 // pred_region
        %p479 = scmp.lt.s32.totalorder %s27, 1
        %s480 = scalar_select %p479, %s27, 1
        %s481 = smul.addr %s480, 4
        %s482 = smul.addr %s481, 4
        %s483 = scalar_lea.vmem %s9, %s482
      $region56: #{reward_model_forward.2} parent=19 // pred_fallthru
        _
      // Predicated region
      $region57: #{reward_model_forward.2} parent=19 // pred_check
        %p484 = pneg %p311
      $region58: #{reward_model_forward.2} parent=19 // pred_check_branch
        %486 = sbr.rel (%p484) target = $region60
      $region59: #{reward_model_forward.2} parent=19 // pred_region
        %p487 = scmp.lt.s32.totalorder %s27, 1
        %s488 = scalar_select %p487, %s27, 1
        %s489 = scalar_lea.vmem %s10, %s488
      $region60: #{reward_model_forward.2} parent=19 // pred_fallthru
        _
      // Predicated region
      $region61: #{reward_model_forward.2} parent=19 // pred_check
        %p490 = pneg %p337
      $region62: #{reward_model_forward.2} parent=19 // pred_check_branch
        %492 = sbr.rel (%p490) target = $region64
      $region63: #{reward_model_forward.2} parent=19 // pred_region
        %p493 = scmp.lt.s32.totalorder %s27, 1
        %s494 = scalar_select %p493, %s27, 1
        %s495 = smul.addr %s494, 16
        %s496 = smul.addr %s495, 4
        %s497 = scalar_lea.vmem %s11, %s496
      $region64: #{reward_model_forward.2} parent=19 // pred_fallthru
        _
      // Predicated region
      $region65: #{reward_model_forward.2} parent=19 // pred_check
        %p498 = pneg %p363
      $region66: #{reward_model_forward.2} parent=19 // pred_check_branch
        %500 = sbr.rel (%p498) target = $region68
      $region67: #{reward_model_forward.2} parent=19 // pred_region
        %p501 = scmp.lt.s32.totalorder %s27, 1
        %s502 = scalar_select %p501, %s27, 1
        %s503 = scalar_lea.vmem %s12, %s502
      $region68: #{reward_model_forward.2} parent=19 // pred_fallthru
        _
    $region20: #{reward_model_forward.2} parent=5 // pred_fallthru
      _
    %p504 = scmp.le.s32.totalorder 1, %s19
    %p505 = scmp.lt.s32.totalorder %s19, 3
    %p506 = pnand %p504, %p505
    %p507 = pneg %p506
    // Predicated region
    $region69: #{reward_model_forward.2} parent=5 // pred_check
      _
    $region70: #{reward_model_forward.2} parent=5 // pred_check_branch
      %509 = sbr.rel (%p506) target = $region72
    $region71: #{reward_model_forward.2} parent=5 // pred_region
      %s510 = ssub.s32 %s19, 1
      %s511 = smul.u32 2, %s28
      %p512 = scmp.lt.s32.totalorder %s511, 1
      %s513 = scalar_select %p512, %s511, 1
      %s514 = smul.addr %s513, 8
      %s515 = scalar_lea.vmem %s0, %s514
      %p516 = pneg %p57
      %p517 = pneg %p54
      %p518 = scmp.lt.s32.totalorder %s29, 1
      %s519 = scalar_select %p518, %s29, 1
      %s520 = scalar_lea.vmem %s1, %s519
      %p521 = pneg %p83
      %p522 = pneg %p80
      %p523 = scmp.lt.s32.totalorder %s29, 1
      %s524 = scalar_select %p523, %s29, 1
      %s525 = scalar_lea.vmem %s2, %s524
      %p526 = pneg %p109
      %p527 = pneg %p106
      %p528 = scmp.lt.s32.totalorder %s29, 1
      %s529 = scalar_select %p528, %s29, 1
      %s530 = smul.addr %s529, 12
      %s531 = smul.addr %s530, 4
      %s532 = scalar_lea.vmem %s3, %s531
      %p533 = pneg %p135
      %p534 = pneg %p132
      %p535 = scmp.lt.s32.totalorder %s29, 1
      %s536 = scalar_select %p535, %s29, 1
      %s537 = smul.addr %s536, 3
      %s538 = scalar_lea.vmem %s4, %s537
      %p539 = pneg %p161
      %p540 = pneg %p158
      %p541 = scmp.lt.s32.totalorder %s29, 1
      %s542 = scalar_select %p541, %s29, 1
      %s543 = smul.addr %s542, 4
      %s544 = smul.addr %s543, 4
      %s545 = scalar_lea.vmem %s5, %s544
      %p546 = pneg %p187
      %p547 = pneg %p184
      %p548 = scmp.lt.s32.totalorder %s29, 1
      %s549 = scalar_select %p548, %s29, 1
      %s550 = scalar_lea.vmem %s6, %s549
      %p551 = pneg %p213
      %p552 = pneg %p210
      %p553 = scmp.lt.s32.totalorder %s29, 1
      %s554 = scalar_select %p553, %s29, 1
      %s555 = scalar_lea.vmem %s7, %s554
      %p556 = pneg %p239
      %p557 = pneg %p236
      %p558 = scmp.lt.s32.totalorder %s29, 1
      %s559 = scalar_select %p558, %s29, 1
      %s560 = scalar_lea.vmem %s8, %s559
      %p561 = pneg %p265
      %p562 = pneg %p262
      %p563 = scmp.lt.s32.totalorder %s29, 1
      %s564 = scalar_select %p563, %s29, 1
      %s565 = smul.addr %s564, 4
      %s566 = smul.addr %s565, 4
      %s567 = scalar_lea.vmem %s9, %s566
      %p568 = pneg %p291
      %p569 = pneg %p288
      %p570 = scmp.lt.s32.totalorder %s29, 1
      %s571 = scalar_select %p570, %s29, 1
      %s572 = scalar_lea.vmem %s10, %s571
      %p573 = pneg %p317
      %p574 = pneg %p314
      %p575 = scmp.lt.s32.totalorder %s29, 1
      %s576 = scalar_select %p575, %s29, 1
      %s577 = smul.addr %s576, 16
      %s578 = smul.addr %s577, 4
      %s579 = scalar_lea.vmem %s11, %s578
      %p580 = pneg %p343
      %p581 = pneg %p340
      %p582 = scmp.lt.s32.totalorder %s29, 1
      %s583 = scalar_select %p582, %s29, 1
      %s584 = scalar_lea.vmem %s12, %s583
      %p585 = pneg %p369
      %p586 = pneg %p366
      %p587 = pneg %p395
      %p588 = pneg %p392
      %s589 = smul.u32 2, %s28
      %p590 = scmp.lt.s32.totalorder %s589, 1
      %s591 = scalar_select %p590, %s589, 1
      %s592 = smul.addr %s591, 8
      %s593 = scalar_lea.vmem %s13, %s592
      %s594 = smul.u32 2, %s28
      %p595 = scmp.lt.s32.totalorder %s594, 1
      %s596 = scalar_select %p595, %s594, 1
      %s597 = smul.addr %s596, 8
      %s598 = scalar_lea.vmem %s0, %s597
      %s599 = smul.u32 2, %s28
      %p600 = scmp.lt.s32.totalorder %s29, 1
      %s601 = scalar_select %p600, %s29, 1
      %s602 = scalar_lea.vmem %s1, %s601
      %p603 = scmp.lt.s32.totalorder %s29, 1
      %s604 = scalar_select %p603, %s29, 1
      %s605 = scalar_lea.vmem %s2, %s604
      %p606 = scmp.lt.s32.totalorder %s29, 1
      %s607 = scalar_select %p606, %s29, 1
      %s608 = smul.addr %s607, 12
      %s609 = smul.addr %s608, 4
      %s610 = scalar_lea.vmem %s3, %s609
      %p611 = scmp.lt.s32.totalorder %s29, 1
      %s612 = scalar_select %p611, %s29, 1
      %s613 = smul.addr %s612, 3
      %s614 = scalar_lea.vmem %s4, %s613
      %p615 = scmp.lt.s32.totalorder %s29, 1
      %s616 = scalar_select %p615, %s29, 1
      %s617 = smul.addr %s616, 4
      %s618 = smul.addr %s617, 4
      %s619 = scalar_lea.vmem %s5, %s618
      %p620 = scmp.lt.s32.totalorder %s29, 1
      %s621 = scalar_select %p620, %s29, 1
      %s622 = scalar_lea.vmem %s6, %s621
      %p623 = scmp.lt.s32.totalorder %s29, 1
      %s624 = scalar_select %p623, %s29, 1
      %s625 = scalar_lea.vmem %s7, %s624
      %p626 = scmp.lt.s32.totalorder %s29, 1
      %s627 = scalar_select %p626, %s29, 1
      %s628 = scalar_lea.vmem %s8, %s627
      %p629 = scmp.lt.s32.totalorder %s29, 1
      %s630 = scalar_select %p629, %s29, 1
      %s631 = smul.addr %s630, 4
      %s632 = smul.addr %s631, 4
      %s633 = scalar_lea.vmem %s9, %s632
      %p634 = scmp.lt.s32.totalorder %s29, 1
      %s635 = scalar_select %p634, %s29, 1
      %s636 = scalar_lea.vmem %s10, %s635
      %p637 = scmp.lt.s32.totalorder %s29, 1
      %s638 = scalar_select %p637, %s29, 1
      %s639 = smul.addr %s638, 16
      %s640 = smul.addr %s639, 4
      %s641 = scalar_lea.vmem %s11, %s640
      %p642 = scmp.lt.s32.totalorder %s29, 1
      %s643 = scalar_select %p642, %s29, 1
      %s644 = scalar_lea.vmem %s12, %s643
      %s645 = smul.u32 2, %s28
      %p646 = scmp.lt.s32.totalorder %s645, 1
      %s647 = scalar_select %p646, %s645, 1
      %s648 = smul.addr %s647, 8
      %s649 = scalar_lea.vmem %s13, %s648
      %s650 = smul.u32 2, %s28
      %p652 = scmp.eq.s32.totalorder %s29, 0
      // Predicated region
      $region73: #{reward_model_forward.2} parent=71 // pred_check
        %p653 = pneg %p652
      $region74: #{reward_model_forward.2} parent=71 // pred_check_branch
        %655 = sbr.rel (%p653) target = $region76
      $region75: #{reward_model_forward.2} parent=71 // pred_region
        %v656 = vld [vmem:[%s598] sm:$0xff]
        %v657 = vld [vmem:[%s598 + $0x8] sm:$0xff]
        %vm658 = vcmask 261120
        %659 = vst.msk [vmem:[#allocation2] sm:$0xff] %vm658, %v656
        %660 = vst.msk [vmem:[#allocation2 + $0x8] sm:$0xff] %vm658, %v657
      $region76: #{reward_model_forward.2} parent=71 // pred_fallthru
        _
      %v661 = vld [vmem:[#allocation2] sm:$0xff]
      %v662 = vld [vmem:[#allocation2 + $0x8] sm:$0xff]
      %v663 = vld [vmem:[%s602] sm:$0x1]
      %v664 = vld [vmem:[%s605] sm:$0x1]
      %vm665 = vcmask 261120
      %v666 = vsel %vm665, %v661, 0.0
      %667 = vadd.xlane.f32.xlu0 %v666
      %v668 = vpop.xlane.xlu0 %667
      %v669 = vsel %vm665, %v662, 0.0
      %670 = vadd.xlane.f32.xlu0 %v669
      %v671 = vpop.xlane.xlu0 %670
      %v672 = vrcp.pop 32.0
      %v673 = vmul.f32 %v668, %v672
      %v674 = vmul.f32 %v671, %v672
      %v675 = vsub.f32 %v661, %v673
      %v676 = vsub.f32 %v662, %v674
      %v677 = vmul.f32 %v675, %v675
      %v678 = vmul.f32 %v676, %v676
      %v679 = vsel %vm665, %v677, 0.0
      %680 = vadd.xlane.f32.xlu0 %v679
      %v681 = vpop.xlane.xlu0 %680
      %v682 = vsel %vm665, %v678, 0.0
      %683 = vadd.xlane.f32.xlu0 %v682
      %v684 = vpop.xlane.xlu0 %683
      %v685 = vmul.f32 %v681, %v672
      %v686 = vmul.f32 %v684, %v672
      %v687 = vadd.f32 %v685, 1e-05
      %v688 = vadd.f32 %v686, 1e-05
      %v689 = vrsqrt.pop %v687
      %v690 = vrsqrt.pop %v688
      %v691 = vmul.f32 %v675, %v689
      %v692 = vmul.f32 %v676, %v690
      %v694 = vlaneseq
      %v695 = vshrl.u32 %v694, 7
      %v696 = vsub.s32 0, %v695
      %v697 = vrot.slane %v663, %v696
      %v699 = vmul.f32 %v691, %v697
      %v700 = vmul.f32 %v692, %v697
      %v702 = vlaneseq
      %v703 = vshrl.u32 %v702, 7
      %v704 = vsub.s32 0, %v703
      %v705 = vrot.slane %v664, %v704
      %v707 = vadd.f32 %v699, %v705
      %v708 = vadd.f32 %v700, %v705
      %v709 = vpack.c.bf16 %v707, %v707
      %v710 = vpack.c.bf16 %v708, %v708
      %v711 = vld [vmem:[%s610] sm:$0xf]
      %v712 = vld [vmem:[%s610 + $0x4] sm:$0xf]
      %v713 = vld [vmem:[%s610 + $0x8] sm:$0xf]
      %v714 = vld [vmem:[%s610 + $0xc] sm:$0xf]
      %v715 = vld [vmem:[%s614] sm:$0x1]
      %v717 = vlaneseq
      %v718 = vshrl.u32 %v717, 7
      %v719 = vsub.s32 0, %v718
      %v720 = vrot.slane %v715, %v719
      %v724 = vunpack.c.l.b16 %v709
      %v725 = vunpack.c.l.b16 %v710
      %v726 = vpack.c.b16 %v725, %v724
      %v731 = vunpack.c.l.b16 %v711
      %v732 = vunpack.c.l.b16 %v712
      %v733 = vunpack.c.l.b16 %v713
      %v734 = vunpack.c.l.b16 %v714
      %v735 = vpack.c.b16 %v732, %v731
      %v736 = vpack.c.b16 %v734, %v733
      %v740 = vsel %vm665, %v726, 0
      %742 = vmatprep.subr.bf16.mxu0 0
      %743 = vmatpush1.bf16.msra.mxu0 0
      %744 = vmatprep.subr.bf16.mxu0 0
      %745 = vmatpush1.bf16.msra.mxu0 0
      %746 = vmatprep.subr.bf16.mxu0 0
      %747 = vmatpush1.bf16.msra.mxu0 0
      %748 = vmatprep.subr.bf16.mxu0 0
      %749 = vmatpush1.bf16.msra.mxu0 0
      %750 = vmatprep.subr.bf16.mxu0 0
      %751 = vmatpush1.bf16.msra.mxu0 0
      %752 = vmatprep.subr.bf16.mxu0 0
      %753 = vmatpush1.bf16.msra.mxu0 0
      %754 = vmatprep.subr.bf16.mxu0 0
      %755 = vmatpush1.bf16.msra.mxu0 %v736
      %756 = vmatprep.subr.bf16.mxu0 0
      %757 = vmatpush1.bf16.msra.mxu0 %v735
      %758 = vmatprep.subr.bf16.mxu0 0
      %759 = vmatpush2.bf16.msra.mxu0 0
      %760 = vmatprep.subr.bf16.mxu0 0
      %761 = vmatpush2.bf16.msra.mxu0 0
      %762 = vmatprep.subr.bf16.mxu0 0
      %763 = vmatpush2.bf16.msra.mxu0 0
      %764 = vmatprep.subr.bf16.mxu0 0
      %765 = vmatpush2.bf16.msra.mxu0 0
      %766 = vmatprep.subr.bf16.mxu0 0
      %767 = vmatpush2.bf16.msra.mxu0 0
      %768 = vmatprep.subr.bf16.mxu0 0
      %769 = vmatpush2.bf16.msra.mxu0 0
      %770 = vmatprep.subr.bf16.mxu0 0
      %771 = vmatpush2.bf16.msra.mxu0 0
      %772 = vmatprep.subr.bf16.mxu0 0
      %773 = vmatpush2.bf16.msra.mxu0 0
      %774 = vmatprep.mubr.bf16.mxu0 0
      %775 = vmatmul.mubr.bf16.gmra.mxu0 %v740
      %v776 = vpop.f32.mrf.mxu0
      %v777 = vadd.f32 %v720, %v776
      %v778 = vpop.f32.mrf.mxu0
      %v779 = vpop.f32.mrf.mxu0
      %v780 = vadd.f32 %v720, %v779
      %v781 = vpop.f32.mrf.mxu0
      %782 = vdwg.mxu0
      %s783 = scalar_lea.vmem %s610, 16
      %v784 = vld [vmem:[%s783] sm:$0xf]
      %v785 = vld [vmem:[%s783 + $0x4] sm:$0xf]
      %v786 = vld [vmem:[%s783 + $0x8] sm:$0xf]
      %v787 = vld [vmem:[%s783 + $0xc] sm:$0xf]
      %s788 = scalar_lea.vmem %s614, 1
      %v789 = vld [vmem:[%s788] sm:$0x1]
      %v791 = vlaneseq
      %v792 = vshrl.u32 %v791, 7
      %v793 = vsub.s32 0, %v792
      %v794 = vrot.slane %v789, %v793
      %v800 = vunpack.c.l.b16 %v784
      %v801 = vunpack.c.l.b16 %v785
      %v802 = vunpack.c.l.b16 %v786
      %v803 = vunpack.c.l.b16 %v787
      %v804 = vpack.c.b16 %v801, %v800
      %v805 = vpack.c.b16 %v803, %v802
      %808 = vmatprep.subr.bf16.mxu0 0
      %809 = vmatpush1.bf16.msra.mxu0 0
      %810 = vmatprep.subr.bf16.mxu0 0
      %811 = vmatpush1.bf16.msra.mxu0 0
      %812 = vmatprep.subr.bf16.mxu0 0
      %813 = vmatpush1.bf16.msra.mxu0 0
      %814 = vmatprep.subr.bf16.mxu0 0
      %815 = vmatpush1.bf16.msra.mxu0 0
      %816 = vmatprep.subr.bf16.mxu0 0
      %817 = vmatpush1.bf16.msra.mxu0 0
      %818 = vmatprep.subr.bf16.mxu0 0
      %819 = vmatpush1.bf16.msra.mxu0 0
      %820 = vmatprep.subr.bf16.mxu0 0
      %821 = vmatpush1.bf16.msra.mxu0 %v805
      %822 = vmatprep.subr.bf16.mxu0 0
      %823 = vmatpush1.bf16.msra.mxu0 %v804
      %824 = vmatprep.subr.bf16.mxu0 0
      %825 = vmatpush2.bf16.msra.mxu0 0
      %826 = vmatprep.subr.bf16.mxu0 0
      %827 = vmatpush2.bf16.msra.mxu0 0
      %828 = vmatprep.subr.bf16.mxu0 0
      %829 = vmatpush2.bf16.msra.mxu0 0
      %830 = vmatprep.subr.bf16.mxu0 0
      %831 = vmatpush2.bf16.msra.mxu0 0
      %832 = vmatprep.subr.bf16.mxu0 0
      %833 = vmatpush2.bf16.msra.mxu0 0
      %834 = vmatprep.subr.bf16.mxu0 0
      %835 = vmatpush2.bf16.msra.mxu0 0
      %836 = vmatprep.subr.bf16.mxu0 0
      %837 = vmatpush2.bf16.msra.mxu0 0
      %838 = vmatprep.subr.bf16.mxu0 0
      %839 = vmatpush2.bf16.msra.mxu0 0
      %840 = vmatprep.mubr.bf16.mxu0 0
      %841 = vmatmul.mubr.bf16.gmra.mxu0 %v740
      %v842 = vpop.f32.mrf.mxu0
      %v843 = vadd.f32 %v794, %v842
      %v844 = vpop.f32.mrf.mxu0
      %v845 = vpop.f32.mrf.mxu0
      %v846 = vadd.f32 %v794, %v845
      %v847 = vpop.f32.mrf.mxu0
      %848 = vdwg.mxu0
      %s849 = scalar_lea.vmem %s610, 32
      %v850 = vld [vmem:[%s849] sm:$0xf]
      %v851 = vld [vmem:[%s849 + $0x4] sm:$0xf]
      %v852 = vld [vmem:[%s849 + $0x8] sm:$0xf]
      %v853 = vld [vmem:[%s849 + $0xc] sm:$0xf]
      %s854 = scalar_lea.vmem %s614, 2
      %v855 = vld [vmem:[%s854] sm:$0x1]
      %v857 = vlaneseq
      %v858 = vshrl.u32 %v857, 7
      %v859 = vsub.s32 0, %v858
      %v860 = vrot.slane %v855, %v859
      %v866 = vunpack.c.l.b16 %v850
      %v867 = vunpack.c.l.b16 %v851
      %v868 = vunpack.c.l.b16 %v852
      %v869 = vunpack.c.l.b16 %v853
      %v870 = vpack.c.b16 %v867, %v866
      %v871 = vpack.c.b16 %v869, %v868
      %874 = vmatprep.subr.bf16.mxu0 0
      %875 = vmatpush1.bf16.msra.mxu0 0
      %876 = vmatprep.subr.bf16.mxu0 0
      %877 = vmatpush1.bf16.msra.mxu0 0
      %878 = vmatprep.subr.bf16.mxu0 0
      %879 = vmatpush1.bf16.msra.mxu0 0
      %880 = vmatprep.subr.bf16.mxu0 0
      %881 = vmatpush1.bf16.msra.mxu0 0
      %882 = vmatprep.subr.bf16.mxu0 0
      %883 = vmatpush1.bf16.msra.mxu0 0
      %884 = vmatprep.subr.bf16.mxu0 0
      %885 = vmatpush1.bf16.msra.mxu0 0
      %886 = vmatprep.subr.bf16.mxu0 0
      %887 = vmatpush1.bf16.msra.mxu0 %v871
      %888 = vmatprep.subr.bf16.mxu0 0
      %889 = vmatpush1.bf16.msra.mxu0 %v870
      %890 = vmatprep.subr.bf16.mxu0 0
      %891 = vmatpush2.bf16.msra.mxu0 0
      %892 = vmatprep.subr.bf16.mxu0 0
      %893 = vmatpush2.bf16.msra.mxu0 0
      %894 = vmatprep.subr.bf16.mxu0 0
      %895 = vmatpush2.bf16.msra.mxu0 0
      %896 = vmatprep.subr.bf16.mxu0 0
      %897 = vmatpush2.bf16.msra.mxu0 0
      %898 = vmatprep.subr.bf16.mxu0 0
      %899 = vmatpush2.bf16.msra.mxu0 0
      %900 = vmatprep.subr.bf16.mxu0 0
      %901 = vmatpush2.bf16.msra.mxu0 0
      %902 = vmatprep.subr.bf16.mxu0 0
      %903 = vmatpush2.bf16.msra.mxu0 0
      %904 = vmatprep.subr.bf16.mxu0 0
      %905 = vmatpush2.bf16.msra.mxu0 0
      %906 = vmatprep.mubr.bf16.mxu0 0
      %907 = vmatmul.mubr.bf16.gmra.mxu0 %v740
      %v908 = vpop.f32.mrf.mxu0
      %v909 = vadd.f32 %v860, %v908
      %v910 = vpop.f32.mrf.mxu0
      %v911 = vpop.f32.mrf.mxu0
      %v912 = vadd.f32 %v860, %v911
      %v913 = vpop.f32.mrf.mxu0
      %914 = vdwg.mxu0
      %v915 = vmul.f32 %v777, 0.25
      %v916 = vmul.f32 %v780, 0.25
      %v917 = vpack.c.bf16 %v915, %v915
      %v918 = vpack.c.bf16 %v916, %v916
      %v919 = vlaneseq
      %v920 = vshrl.u32 %v919, 7
      %v921 = vpack.c.bf16 %v843, %v843
      %v922 = vpack.c.bf16 %v846, %v846
      %v923 = vpack.c.bf16 %v909, %v909
      %v924 = vpack.c.bf16 %v912, %v912
      %vm925 = vcmask 130048
      %v927 = vsel %vm925, %v917, 0
      %v930 = vsel %vm925, %v921, 0
      %932 = vmatprep.subr.bf16.mxu0 0
      %933 = vmatpush1.bf16.xpose.msra.mxu0 0
      %934 = vmatprep.subr.bf16.mxu0 0
      %935 = vmatpush1.bf16.xpose.msra.mxu0 0
      %936 = vmatprep.subr.bf16.mxu0 0
      %937 = vmatpush1.bf16.xpose.msra.mxu0 0
      %938 = vmatprep.subr.bf16.mxu0 0
      %939 = vmatpush1.bf16.xpose.msra.mxu0 0
      %940 = vmatprep.subr.bf16.mxu0 0
      %941 = vmatpush1.bf16.xpose.msra.mxu0 0
      %942 = vmatprep.subr.bf16.mxu0 0
      %943 = vmatpush1.bf16.xpose.msra.mxu0 0
      %944 = vmatprep.subr.bf16.mxu0 0
      %945 = vmatpush1.bf16.xpose.msra.mxu0 0
      %946 = vmatprep.subr.bf16.mxu0 0
      %947 = vmatpush1.bf16.xpose.msra.mxu0 %v930
      %948 = vmatprep.subr.bf16.mxu0 0
      %949 = vmatpush2.bf16.xpose.msra.mxu0 0
      %950 = vmatprep.subr.bf16.mxu0 0
      %951 = vmatpush2.bf16.xpose.msra.mxu0 0
      %952 = vmatprep.subr.bf16.mxu0 0
      %953 = vmatpush2.bf16.xpose.msra.mxu0 0
      %954 = vmatprep.subr.bf16.mxu0 0
      %955 = vmatpush2.bf16.xpose.msra.mxu0 0
      %956 = vmatprep.subr.bf16.mxu0 0
      %957 = vmatpush2.bf16.xpose.msra.mxu0 0
      %958 = vmatprep.subr.bf16.mxu0 0
      %959 = vmatpush2.bf16.xpose.msra.mxu0 0
      %960 = vmatprep.subr.bf16.mxu0 0
      %961 = vmatpush2.bf16.xpose.msra.mxu0 0
      %962 = vmatprep.subr.bf16.mxu0 0
      %963 = vmatpush2.bf16.xpose.msra.mxu0 0
      %964 = vmatprep.mubr.bf16.mxu0 0
      %965 = vmatmul.mubr.bf16.gmra.mxu0 %v927
      %v966 = vpop.f32.mrf.mxu0
      %v967 = vadd.f32 0.0, %v966
      %v968 = vpop.f32.mrf.mxu0
      %v969 = vpop.f32.mrf.mxu0
      %v970 = vpop.f32.mrf.mxu0
      %971 = vdwg.mxu0
      %v973 = vsel %vm925, %v918, 0
      %v976 = vsel %vm925, %v922, 0
      %978 = vmatprep.subr.bf16.mxu0 0
      %979 = vmatpush1.bf16.xpose.msra.mxu0 0
      %980 = vmatprep.subr.bf16.mxu0 0
      %981 = vmatpush1.bf16.xpose.msra.mxu0 0
      %982 = vmatprep.subr.bf16.mxu0 0
      %983 = vmatpush1.bf16.xpose.msra.mxu0 0
      %984 = vmatprep.subr.bf16.mxu0 0
      %985 = vmatpush1.bf16.xpose.msra.mxu0 0
      %986 = vmatprep.subr.bf16.mxu0 0
      %987 = vmatpush1.bf16.xpose.msra.mxu0 0
      %988 = vmatprep.subr.bf16.mxu0 0
      %989 = vmatpush1.bf16.xpose.msra.mxu0 0
      %990 = vmatprep.subr.bf16.mxu0 0
      %991 = vmatpush1.bf16.xpose.msra.mxu0 0
      %992 = vmatprep.subr.bf16.mxu0 0
      %993 = vmatpush1.bf16.xpose.msra.mxu0 %v976
      %994 = vmatprep.subr.bf16.mxu0 0
      %995 = vmatpush2.bf16.xpose.msra.mxu0 0
      %996 = vmatprep.subr.bf16.mxu0 0
      %997 = vmatpush2.bf16.xpose.msra.mxu0 0
      %998 = vmatprep.subr.bf16.mxu0 0
      %999 = vmatpush2.bf16.xpose.msra.mxu0 0
      %1000 = vmatprep.subr.bf16.mxu0 0
      %1001 = vmatpush2.bf16.xpose.msra.mxu0 0
      %1002 = vmatprep.subr.bf16.mxu0 0
      %1003 = vmatpush2.bf16.xpose.msra.mxu0 0
      %1004 = vmatprep.subr.bf16.mxu0 0
      %1005 = vmatpush2.bf16.xpose.msra.mxu0 0
      %1006 = vmatprep.subr.bf16.mxu0 0
      %1007 = vmatpush2.bf16.xpose.msra.mxu0 0
      %1008 = vmatprep.subr.bf16.mxu0 0
      %1009 = vmatpush2.bf16.xpose.msra.mxu0 0
      %1010 = vmatprep.mubr.bf16.mxu0 0
      %1011 = vmatmul.mubr.bf16.gmra.mxu0 %v973
      %v1012 = vpop.f32.mrf.mxu0
      %v1013 = vadd.f32 0.0, %v1012
      %v1014 = vpop.f32.mrf.mxu0
      %v1015 = vpop.f32.mrf.mxu0
      %v1016 = vpop.f32.mrf.mxu0
      %1017 = vdwg.mxu0
      %v1018 = vlaneseq
      %v1019 = vand.u32 %v1018, 127
      %vm1020 = vcmp.le.s32.totalorder %v1019, %v920
      %v1021 = vsel %vm1020, 1, 0
      %vm1022 = vcmp.eq.s32.totalorder %v1021, 1
      %v1023 = vsel %vm1022, %v967, -1e+30
      %v1024 = vsel %vm1022, %v1013, -1e+30
      %vm1025 = vcmask 64512
      %v1026 = vsel %vm1025, %v1023, -inf
      %1027 = vmax.xlane.f32.xlu0 %v1026
      %v1028 = vpop.xlane.xlu0 %1027
      %v1029 = vsel %vm1025, %v1024, -inf
      %1030 = vmax.xlane.f32.xlu0 %v1029
      %v1031 = vpop.xlane.xlu0 %1030
      %v1032 = vmax.f32 %v1028, -1e+30
      %v1033 = vmax.f32 %v1031, -1e+30
      %v1034 = vsub.f32 -1e+30, %v1032
      %v1035 = vsub.f32 -1e+30, %v1033
      %v1036 = vmul.f32 %v1034, 1.442695
      %v1037 = vpow.pop %v1036
      %v1038 = vmul.f32 %v1035, 1.442695
      %v1039 = vpow.pop %v1038
      %v1040 = vsub.f32 %v1023, %v1032
      %v1041 = vsub.f32 %v1024, %v1033
      %v1042 = vmul.f32 %v1040, 1.442695
      %v1043 = vpow.pop %v1042
      %v1044 = vmul.f32 %v1041, 1.442695
      %v1045 = vpow.pop %v1044
      %v1046 = vmul.f32 %v1037, 0.0
      %v1047 = vmul.f32 %v1039, 0.0
      %v1048 = vsel %vm1025, %v1043, 0.0
      %1049 = vadd.xlane.f32.xlu0 %v1048
      %v1050 = vpop.xlane.xlu0 %1049
      %v1051 = vsel %vm1025, %v1045, 0.0
      %1052 = vadd.xlane.f32.xlu0 %v1051
      %v1053 = vpop.xlane.xlu0 %1052
      %v1054 = vadd.f32 %v1046, %v1050
      %v1055 = vadd.f32 %v1047, %v1053
      %v1056 = vpack.c.bf16 %v1043, %v1043
      %v1057 = vpack.c.bf16 %v1045, %v1045
      %v1059 = vsel %vm1025, %v1056, 0
      %vm1061 = vcmask 1043456
      %v1063 = vsel %vm1061, %v923, 0
      %1065 = vmatprep.subr.bf16.mxu0 0
      %1066 = vmatpush1.bf16.msra.mxu0 0
      %1067 = vmatprep.subr.bf16.mxu0 0
      %1068 = vmatpush1.bf16.msra.mxu0 0
      %1069 = vmatprep.subr.bf16.mxu0 0
      %1070 = vmatpush1.bf16.msra.mxu0 0
      %1071 = vmatprep.subr.bf16.mxu0 0
      %1072 = vmatpush1.bf16.msra.mxu0 0
      %1073 = vmatprep.subr.bf16.mxu0 0
      %1074 = vmatpush1.bf16.msra.mxu0 0
      %1075 = vmatprep.subr.bf16.mxu0 0
      %1076 = vmatpush1.bf16.msra.mxu0 0
      %1077 = vmatprep.subr.bf16.mxu0 0
      %1078 = vmatpush1.bf16.msra.mxu0 0
      %1079 = vmatprep.subr.bf16.mxu0 0
      %1080 = vmatpush1.bf16.msra.mxu0 %v1063
      %1081 = vmatprep.subr.bf16.mxu0 0
      %1082 = vmatpush2.bf16.msra.mxu0 0
      %1083 = vmatprep.subr.bf16.mxu0 0
      %1084 = vmatpush2.bf16.msra.mxu0 0
      %1085 = vmatprep.subr.bf16.mxu0 0
      %1086 = vmatpush2.bf16.msra.mxu0 0
      %1087 = vmatprep.subr.bf16.mxu0 0
      %1088 = vmatpush2.bf16.msra.mxu0 0
      %1089 = vmatprep.subr.bf16.mxu0 0
      %1090 = vmatpush2.bf16.msra.mxu0 0
      %1091 = vmatprep.subr.bf16.mxu0 0
      %1092 = vmatpush2.bf16.msra.mxu0 0
      %1093 = vmatprep.subr.bf16.mxu0 0
      %1094 = vmatpush2.bf16.msra.mxu0 0
      %1095 = vmatprep.subr.bf16.mxu0 0
      %1096 = vmatpush2.bf16.msra.mxu0 0
      %1097 = vmatprep.mubr.bf16.mxu0 0
      %1098 = vmatmul.mubr.bf16.gmra.mxu0 %v1059
      %v1099 = vpop.f32.mrf.mxu0
      %v1100 = vadd.f32 0.0, %v1099
      %v1101 = vpop.f32.mrf.mxu0
      %v1102 = vpop.f32.mrf.mxu0
      %v1103 = vpop.f32.mrf.mxu0
      %1104 = vdwg.mxu0
      %v1106 = vsel %vm1025, %v1057, 0
      %v1109 = vsel %vm1061, %v924, 0
      %1111 = vmatprep.subr.bf16.mxu0 0
      %1112 = vmatpush1.bf16.msra.mxu0 0
      %1113 = vmatprep.subr.bf16.mxu0 0
      %1114 = vmatpush1.bf16.msra.mxu0 0
      %1115 = vmatprep.subr.bf16.mxu0 0
      %1116 = vmatpush1.bf16.msra.mxu0 0
      %1117 = vmatprep.subr.bf16.mxu0 0
      %1118 = vmatpush1.bf16.msra.mxu0 0
      %1119 = vmatprep.subr.bf16.mxu0 0
      %1120 = vmatpush1.bf16.msra.mxu0 0
      %1121 = vmatprep.subr.bf16.mxu0 0
      %1122 = vmatpush1.bf16.msra.mxu0 0
      %1123 = vmatprep.subr.bf16.mxu0 0
      %1124 = vmatpush1.bf16.msra.mxu0 0
      %1125 = vmatprep.subr.bf16.mxu0 0
      %1126 = vmatpush1.bf16.msra.mxu0 %v1109
      %1127 = vmatprep.subr.bf16.mxu0 0
      %1128 = vmatpush2.bf16.msra.mxu0 0
      %1129 = vmatprep.subr.bf16.mxu0 0
      %1130 = vmatpush2.bf16.msra.mxu0 0
      %1131 = vmatprep.subr.bf16.mxu0 0
      %1132 = vmatpush2.bf16.msra.mxu0 0
      %1133 = vmatprep.subr.bf16.mxu0 0
      %1134 = vmatpush2.bf16.msra.mxu0 0
      %1135 = vmatprep.subr.bf16.mxu0 0
      %1136 = vmatpush2.bf16.msra.mxu0 0
      %1137 = vmatprep.subr.bf16.mxu0 0
      %1138 = vmatpush2.bf16.msra.mxu0 0
      %1139 = vmatprep.subr.bf16.mxu0 0
      %1140 = vmatpush2.bf16.msra.mxu0 0
      %1141 = vmatprep.subr.bf16.mxu0 0
      %1142 = vmatpush2.bf16.msra.mxu0 0
      %1143 = vmatprep.mubr.bf16.mxu0 0
      %1144 = vmatmul.mubr.bf16.gmra.mxu0 %v1106
      %v1145 = vpop.f32.mrf.mxu0
      %v1146 = vadd.f32 0.0, %v1145
      %v1147 = vpop.f32.mrf.mxu0
      %v1148 = vpop.f32.mrf.mxu0
      %v1149 = vpop.f32.mrf.mxu0
      %1150 = vdwg.mxu0
      %v1151 = vadd.f32 %v1046, %v1100
      %v1152 = vadd.f32 %v1047, %v1146
      %v1153 = vrcp.pop %v1054
      %v1154 = vrcp.pop %v1055
      %v1155 = vmul.f32 %v1151, %v1153
      %v1156 = vmul.f32 %v1152, %v1154
      %1158 = vrot.lane.b32.xlu0 %v917, 112
      %v1159 = vpop.permute.xlu0 %1158
      %1161 = vrot.lane.b32.xlu0 %v921, 112
      %v1162 = vpop.permute.xlu0 %1161
      %v1164 = vsel %vm925, %v1159, 0
      %v1167 = vsel %vm925, %v1162, 0
      %1169 = vmatprep.subr.bf16.mxu0 0
      %1170 = vmatpush1.bf16.xpose.msra.mxu0 0
      %1171 = vmatprep.subr.bf16.mxu0 0
      %1172 = vmatpush1.bf16.xpose.msra.mxu0 0
      %1173 = vmatprep.subr.bf16.mxu0 0
      %1174 = vmatpush1.bf16.xpose.msra.mxu0 0
      %1175 = vmatprep.subr.bf16.mxu0 0
      %1176 = vmatpush1.bf16.xpose.msra.mxu0 0
      %1177 = vmatprep.subr.bf16.mxu0 0
      %1178 = vmatpush1.bf16.xpose.msra.mxu0 0
      %1179 = vmatprep.subr.bf16.mxu0 0
      %1180 = vmatpush1.bf16.xpose.msra.mxu0 0
      %1181 = vmatprep.subr.bf16.mxu0 0
      %1182 = vmatpush1.bf16.xpose.msra.mxu0 0
      %1183 = vmatprep.subr.bf16.mxu0 0
      %1184 = vmatpush1.bf16.xpose.msra.mxu0 %v1167
      %1185 = vmatprep.subr.bf16.mxu0 0
      %1186 = vmatpush2.bf16.xpose.msra.mxu0 0
      %1187 = vmatprep.subr.bf16.mxu0 0
      %1188 = vmatpush2.bf16.xpose.msra.mxu0 0
      %1189 = vmatprep.subr.bf16.mxu0 0
      %1190 = vmatpush2.bf16.xpose.msra.mxu0 0
      %1191 = vmatprep.subr.bf16.mxu0 0
      %1192 = vmatpush2.bf16.xpose.msra.mxu0 0
      %1193 = vmatprep.subr.bf16.mxu0 0
      %1194 = vmatpush2.bf16.xpose.msra.mxu0 0
      %1195 = vmatprep.subr.bf16.mxu0 0
      %1196 = vmatpush2.bf16.xpose.msra.mxu0 0
      %1197 = vmatprep.subr.bf16.mxu0 0
      %1198 = vmatpush2.bf16.xpose.msra.mxu0 0
      %1199 = vmatprep.subr.bf16.mxu0 0
      %1200 = vmatpush2.bf16.xpose.msra.mxu0 0
      %1201 = vmatprep.mubr.bf16.mxu0 0
      %1202 = vmatmul.mubr.bf16.gmra.mxu0 %v1164
      %v1203 = vpop.f32.mrf.mxu0
      %v1204 = vadd.f32 0.0, %v1203
      %v1205 = vpop.f32.mrf.mxu0
      %v1206 = vpop.f32.mrf.mxu0
      %v1207 = vpop.f32.mrf.mxu0
      %1208 = vdwg.mxu0
      %1210 = vrot.lane.b32.xlu0 %v918, 112
      %v1211 = vpop.permute.xlu0 %1210
      %1213 = vrot.lane.b32.xlu0 %v922, 112
      %v1214 = vpop.permute.xlu0 %1213
      %v1216 = vsel %vm925, %v1211, 0
      %v1219 = vsel %vm925, %v1214, 0
      %1221 = vmatprep.subr.bf16.mxu0 0
      %1222 = vmatpush1.bf16.xpose.msra.mxu0 0
      %1223 = vmatprep.subr.bf16.mxu0 0
      %1224 = vmatpush1.bf16.xpose.msra.mxu0 0
      %1225 = vmatprep.subr.bf16.mxu0 0
      %1226 = vmatpush1.bf16.xpose.msra.mxu0 0
      %1227 = vmatprep.subr.bf16.mxu0 0
      %1228 = vmatpush1.bf16.xpose.msra.mxu0 0
      %1229 = vmatprep.subr.bf16.mxu0 0
      %1230 = vmatpush1.bf16.xpose.msra.mxu0 0
      %1231 = vmatprep.subr.bf16.mxu0 0
      %1232 = vmatpush1.bf16.xpose.msra.mxu0 0
      %1233 = vmatprep.subr.bf16.mxu0 0
      %1234 = vmatpush1.bf16.xpose.msra.mxu0 0
      %1235 = vmatprep.subr.bf16.mxu0 0
      %1236 = vmatpush1.bf16.xpose.msra.mxu0 %v1219
      %1237 = vmatprep.subr.bf16.mxu0 0
      %1238 = vmatpush2.bf16.xpose.msra.mxu0 0
      %1239 = vmatprep.subr.bf16.mxu0 0
      %1240 = vmatpush2.bf16.xpose.msra.mxu0 0
      %1241 = vmatprep.subr.bf16.mxu0 0
      %1242 = vmatpush2.bf16.xpose.msra.mxu0 0
      %1243 = vmatprep.subr.bf16.mxu0 0
      %1244 = vmatpush2.bf16.xpose.msra.mxu0 0
      %1245 = vmatprep.subr.bf16.mxu0 0
      %1246 = vmatpush2.bf16.xpose.msra.mxu0 0
      %1247 = vmatprep.subr.bf16.mxu0 0
      %1248 = vmatpush2.bf16.xpose.msra.mxu0 0
      %1249 = vmatprep.subr.bf16.mxu0 0
      %1250 = vmatpush2.bf16.xpose.msra.mxu0 0
      %1251 = vmatprep.subr.bf16.mxu0 0
      %1252 = vmatpush2.bf16.xpose.msra.mxu0 0
      %1253 = vmatprep.mubr.bf16.mxu0 0
      %1254 = vmatmul.mubr.bf16.gmra.mxu0 %v1216
      %v1255 = vpop.f32.mrf.mxu0
      %v1256 = vadd.f32 0.0, %v1255
      %v1257 = vpop.f32.mrf.mxu0
      %v1258 = vpop.f32.mrf.mxu0
      %v1259 = vpop.f32.mrf.mxu0
      %1260 = vdwg.mxu0
      %v1261 = vsel %vm1022, %v1204, -1e+30
      %v1262 = vsel %vm1022, %v1256, -1e+30
      %v1263 = vsel %vm1025, %v1261, -inf
      %1264 = vmax.xlane.f32.xlu0 %v1263
      %v1265 = vpop.xlane.xlu0 %1264
      %v1266 = vsel %vm1025, %v1262, -inf
      %1267 = vmax.xlane.f32.xlu0 %v1266
      %v1268 = vpop.xlane.xlu0 %1267
      %v1269 = vmax.f32 %v1265, -1e+30
      %v1270 = vmax.f32 %v1268, -1e+30
      %v1271 = vsub.f32 -1e+30, %v1269
      %v1272 = vsub.f32 -1e+30, %v1270
      %v1273 = vmul.f32 %v1271, 1.442695
      %v1274 = vpow.pop %v1273
      %v1275 = vmul.f32 %v1272, 1.442695
      %v1276 = vpow.pop %v1275
      %v1277 = vsub.f32 %v1261, %v1269
      %v1278 = vsub.f32 %v1262, %v1270
      %v1279 = vmul.f32 %v1277, 1.442695
      %v1280 = vpow.pop %v1279
      %v1281 = vmul.f32 %v1278, 1.442695
      %v1282 = vpow.pop %v1281
      %v1283 = vmul.f32 %v1274, 0.0
      %v1284 = vmul.f32 %v1276, 0.0
      %v1285 = vsel %vm1025, %v1280, 0.0
      %1286 = vadd.xlane.f32.xlu0 %v1285
      %v1287 = vpop.xlane.xlu0 %1286
      %v1288 = vsel %vm1025, %v1282, 0.0
      %1289 = vadd.xlane.f32.xlu0 %v1288
      %v1290 = vpop.xlane.xlu0 %1289
      %v1291 = vadd.f32 %v1283, %v1287
      %v1292 = vadd.f32 %v1284, %v1290
      %v1293 = vpack.c.bf16 %v1280, %v1280
      %v1294 = vpack.c.bf16 %v1282, %v1282
      %1296 = vrot.lane.b32.xlu0 %v923, 112
      %v1297 = vpop.permute.xlu0 %1296
      %v1299 = vsel %vm1025, %v1293, 0
      %v1302 = vsel %vm1061, %v1297, 0
      %1304 = vmatprep.subr.bf16.mxu0 0
      %1305 = vmatpush1.bf16.msra.mxu0 0
      %1306 = vmatprep.subr.bf16.mxu0 0
      %1307 = vmatpush1.bf16.msra.mxu0 0
      %1308 = vmatprep.subr.bf16.mxu0 0
      %1309 = vmatpush1.bf16.msra.mxu0 0
      %1310 = vmatprep.subr.bf16.mxu0 0
      %1311 = vmatpush1.bf16.msra.mxu0 0
      %1312 = vmatprep.subr.bf16.mxu0 0
      %1313 = vmatpush1.bf16.msra.mxu0 0
      %1314 = vmatprep.subr.bf16.mxu0 0
      %1315 = vmatpush1.bf16.msra.mxu0 0
      %1316 = vmatprep.subr.bf16.mxu0 0
      %1317 = vmatpush1.bf16.msra.mxu0 0
      %1318 = vmatprep.subr.bf16.mxu0 0
      %1319 = vmatpush1.bf16.msra.mxu0 %v1302
      %1320 = vmatprep.subr.bf16.mxu0 0
      %1321 = vmatpush2.bf16.msra.mxu0 0
      %1322 = vmatprep.subr.bf16.mxu0 0
      %1323 = vmatpush2.bf16.msra.mxu0 0
      %1324 = vmatprep.subr.bf16.mxu0 0
      %1325 = vmatpush2.bf16.msra.mxu0 0
      %1326 = vmatprep.subr.bf16.mxu0 0
      %1327 = vmatpush2.bf16.msra.mxu0 0
      %1328 = vmatprep.subr.bf16.mxu0 0
      %1329 = vmatpush2.bf16.msra.mxu0 0
      %1330 = vmatprep.subr.bf16.mxu0 0
      %1331 = vmatpush2.bf16.msra.mxu0 0
      %1332 = vmatprep.subr.bf16.mxu0 0
      %1333 = vmatpush2.bf16.msra.mxu0 0
      %1334 = vmatprep.subr.bf16.mxu0 0
      %1335 = vmatpush2.bf16.msra.mxu0 0
      %1336 = vmatprep.mubr.bf16.mxu0 0
      %1337 = vmatmul.mubr.bf16.gmra.mxu0 %v1299
      %v1338 = vpop.f32.mrf.mxu0
      %v1339 = vadd.f32 0.0, %v1338
      %v1340 = vpop.f32.mrf.mxu0
      %v1341 = vpop.f32.mrf.mxu0
      %v1342 = vpop.f32.mrf.mxu0
      %1343 = vdwg.mxu0
      %1345 = vrot.lane.b32.xlu0 %v924, 112
      %v1346 = vpop.permute.xlu0 %1345
      %v1348 = vsel %vm1025, %v1294, 0
      %v1351 = vsel %vm1061, %v1346, 0
      %1353 = vmatprep.subr.bf16.mxu0 0
      %1354 = vmatpush1.bf16.msra.mxu0 0
      %1355 = vmatprep.subr.bf16.mxu0 0
      %1356 = vmatpush1.bf16.msra.mxu0 0
      %1357 = vmatprep.subr.bf16.mxu0 0
      %1358 = vmatpush1.bf16.msra.mxu0 0
      %1359 = vmatprep.subr.bf16.mxu0 0
      %1360 = vmatpush1.bf16.msra.mxu0 0
      %1361 = vmatprep.subr.bf16.mxu0 0
      %1362 = vmatpush1.bf16.msra.mxu0 0
      %1363 = vmatprep.subr.bf16.mxu0 0
      %1364 = vmatpush1.bf16.msra.mxu0 0
      %1365 = vmatprep.subr.bf16.mxu0 0
      %1366 = vmatpush1.bf16.msra.mxu0 0
      %1367 = vmatprep.subr.bf16.mxu0 0
      %1368 = vmatpush1.bf16.msra.mxu0 %v1351
      %1369 = vmatprep.subr.bf16.mxu0 0
      %1370 = vmatpush2.bf16.msra.mxu0 0
      %1371 = vmatprep.subr.bf16.mxu0 0
      %1372 = vmatpush2.bf16.msra.mxu0 0
      %1373 = vmatprep.subr.bf16.mxu0 0
      %1374 = vmatpush2.bf16.msra.mxu0 0
      %1375 = vmatprep.subr.bf16.mxu0 0
      %1376 = vmatpush2.bf16.msra.mxu0 0
      %1377 = vmatprep.subr.bf16.mxu0 0
      %1378 = vmatpush2.bf16.msra.mxu0 0
      %1379 = vmatprep.subr.bf16.mxu0 0
      %1380 = vmatpush2.bf16.msra.mxu0 0
      %1381 = vmatprep.subr.bf16.mxu0 0
      %1382 = vmatpush2.bf16.msra.mxu0 0
      %1383 = vmatprep.subr.bf16.mxu0 0
      %1384 = vmatpush2.bf16.msra.mxu0 0
      %1385 = vmatprep.mubr.bf16.mxu0 0
      %1386 = vmatmul.mubr.bf16.gmra.mxu0 %v1348
      %v1387 = vpop.f32.mrf.mxu0
      %v1388 = vadd.f32 0.0, %v1387
      %v1389 = vpop.f32.mrf.mxu0
      %v1390 = vpop.f32.mrf.mxu0
      %v1391 = vpop.f32.mrf.mxu0
      %1392 = vdwg.mxu0
      %v1393 = vadd.f32 %v1283, %v1339
      %v1394 = vadd.f32 %v1284, %v1388
      %v1395 = vrcp.pop %v1291
      %v1396 = vrcp.pop %v1292
      %v1397 = vmul.f32 %v1393, %v1395
      %v1398 = vmul.f32 %v1394, %v1396
      %1401 = vrot.lane.b32.xlu0 %v1397, 16
      %v1402 = vpop.permute.xlu0 %1401
      %1403 = vrot.lane.b32.xlu0 %v1398, 16
      %v1404 = vpop.permute.xlu0 %1403
      %v1407 = vsel %vm925, %v1155, %v1402
      %v1408 = vsel %vm925, %v1156, %v1404
      %v1409 = vpack.c.bf16 %v1407, %v1407
      %v1410 = vpack.c.bf16 %v1408, %v1408
      %v1411 = vld [vmem:[%s619] sm:$0xf]
      %v1412 = vld [vmem:[%s619 + $0x4] sm:$0xf]
      %v1413 = vld [vmem:[%s619 + $0x8] sm:$0xf]
      %v1414 = vld [vmem:[%s619 + $0xc] sm:$0xf]
      %v1415 = vld [vmem:[%s622] sm:$0x1]
      %v1417 = vlaneseq
      %v1418 = vshrl.u32 %v1417, 7
      %v1419 = vsub.s32 0, %v1418
      %v1420 = vrot.slane %v1415, %v1419
      %v1424 = vunpack.c.l.b16 %v1409
      %v1425 = vunpack.c.l.b16 %v1410
      %v1426 = vpack.c.b16 %v1425, %v1424
      %v1431 = vunpack.c.l.b16 %v1411
      %v1432 = vunpack.c.l.b16 %v1412
      %v1433 = vunpack.c.l.b16 %v1413
      %v1434 = vunpack.c.l.b16 %v1414
      %v1435 = vpack.c.b16 %v1432, %v1431
      %v1436 = vpack.c.b16 %v1434, %v1433
      %v1440 = vsel %vm665, %v1426, 0
      %1442 = vmatprep.subr.bf16.mxu0 0
      %1443 = vmatpush1.bf16.msra.mxu0 0
      %1444 = vmatprep.subr.bf16.mxu0 0
      %1445 = vmatpush1.bf16.msra.mxu0 0
      %1446 = vmatprep.subr.bf16.mxu0 0
      %1447 = vmatpush1.bf16.msra.mxu0 0
      %1448 = vmatprep.subr.bf16.mxu0 0
      %1449 = vmatpush1.bf16.msra.mxu0 0
      %1450 = vmatprep.subr.bf16.mxu0 0
      %1451 = vmatpush1.bf16.msra.mxu0 0
      %1452 = vmatprep.subr.bf16.mxu0 0
      %1453 = vmatpush1.bf16.msra.mxu0 0
      %1454 = vmatprep.subr.bf16.mxu0 0
      %1455 = vmatpush1.bf16.msra.mxu0 %v1436
      %1456 = vmatprep.subr.bf16.mxu0 0
      %1457 = vmatpush1.bf16.msra.mxu0 %v1435
      %1458 = vmatprep.subr.bf16.mxu0 0
      %1459 = vmatpush2.bf16.msra.mxu0 0
      %1460 = vmatprep.subr.bf16.mxu0 0
      %1461 = vmatpush2.bf16.msra.mxu0 0
      %1462 = vmatprep.subr.bf16.mxu0 0
      %1463 = vmatpush2.bf16.msra.mxu0 0
      %1464 = vmatprep.subr.bf16.mxu0 0
      %1465 = vmatpush2.bf16.msra.mxu0 0
      %1466 = vmatprep.subr.bf16.mxu0 0
      %1467 = vmatpush2.bf16.msra.mxu0 0
      %1468 = vmatprep.subr.bf16.mxu0 0
      %1469 = vmatpush2.bf16.msra.mxu0 0
      %1470 = vmatprep.subr.bf16.mxu0 0
      %1471 = vmatpush2.bf16.msra.mxu0 0
      %1472 = vmatprep.subr.bf16.mxu0 0
      %1473 = vmatpush2.bf16.msra.mxu0 0
      %1474 = vmatprep.mubr.bf16.mxu0 0
      %1475 = vmatmul.mubr.bf16.gmra.mxu0 %v1440
      %v1476 = vpop.f32.mrf.mxu0
      %v1477 = vadd.f32 %v1420, %v1476
      %v1478 = vpop.f32.mrf.mxu0
      %v1479 = vpop.f32.mrf.mxu0
      %v1480 = vadd.f32 %v1420, %v1479
      %v1481 = vpop.f32.mrf.mxu0
      %1482 = vdwg.mxu0
      %v1483 = vadd.f32 %v661, %v1477
      %v1484 = vadd.f32 %v662, %v1480
      %v1485 = vld [vmem:[%s625] sm:$0x1]
      %v1486 = vld [vmem:[%s628] sm:$0x1]
      %v1487 = vsel %vm665, %v1483, 0.0
      %1488 = vadd.xlane.f32.xlu0 %v1487
      %v1489 = vpop.xlane.xlu0 %1488
      %v1490 = vsel %vm665, %v1484, 0.0
      %1491 = vadd.xlane.f32.xlu0 %v1490
      %v1492 = vpop.xlane.xlu0 %1491
      %v1493 = vmul.f32 %v1489, %v672
      %v1494 = vmul.f32 %v1492, %v672
      %v1495 = vsub.f32 %v1483, %v1493
      %v1496 = vsub.f32 %v1484, %v1494
      %v1497 = vmul.f32 %v1495, %v1495
      %v1498 = vmul.f32 %v1496, %v1496
      %v1499 = vsel %vm665, %v1497, 0.0
      %1500 = vadd.xlane.f32.xlu0 %v1499
      %v1501 = vpop.xlane.xlu0 %1500
      %v1502 = vsel %vm665, %v1498, 0.0
      %1503 = vadd.xlane.f32.xlu0 %v1502
      %v1504 = vpop.xlane.xlu0 %1503
      %v1505 = vmul.f32 %v1501, %v672
      %v1506 = vmul.f32 %v1504, %v672
      %v1507 = vadd.f32 %v1505, 1e-05
      %v1508 = vadd.f32 %v1506, 1e-05
      %v1509 = vrsqrt.pop %v1507
      %v1510 = vrsqrt.pop %v1508
      %v1511 = vmul.f32 %v1495, %v1509
      %v1512 = vmul.f32 %v1496, %v1510
      %v1514 = vlaneseq
      %v1515 = vshrl.u32 %v1514, 7
      %v1516 = vsub.s32 0, %v1515
      %v1517 = vrot.slane %v1485, %v1516
      %v1519 = vmul.f32 %v1511, %v1517
      %v1520 = vmul.f32 %v1512, %v1517
      %v1522 = vlaneseq
      %v1523 = vshrl.u32 %v1522, 7
      %v1524 = vsub.s32 0, %v1523
      %v1525 = vrot.slane %v1486, %v1524
      %v1527 = vadd.f32 %v1519, %v1525
      %v1528 = vadd.f32 %v1520, %v1525
      %v1529 = vpack.c.bf16 %v1527, %v1527
      %v1530 = vpack.c.bf16 %v1528, %v1528
      %v1531 = vld [vmem:[%s633] sm:$0xf]
      %v1532 = vld [vmem:[%s633 + $0x4] sm:$0xf]
      %v1533 = vld [vmem:[%s633 + $0x8] sm:$0xf]
      %v1534 = vld [vmem:[%s633 + $0xc] sm:$0xf]
      %v1535 = vld [vmem:[%s636] sm:$0x1]
      %v1537 = vlaneseq
      %v1538 = vshrl.u32 %v1537, 7
      %v1539 = vsub.s32 0, %v1538
      %v1540 = vrot.slane %v1535, %v1539
      %v1544 = vunpack.c.l.b16 %v1529
      %v1545 = vunpack.c.l.b16 %v1530
      %v1546 = vpack.c.b16 %v1545, %v1544
      %v1551 = vunpack.c.l.b16 %v1531
      %v1552 = vunpack.c.l.b16 %v1532
      %v1553 = vunpack.c.l.b16 %v1533
      %v1554 = vunpack.c.l.b16 %v1534
      %v1555 = vpack.c.b16 %v1552, %v1551
      %v1556 = vpack.c.b16 %v1554, %v1553
      %v1560 = vsel %vm665, %v1546, 0
      %1562 = vmatprep.subr.bf16.mxu0 0
      %1563 = vmatpush1.bf16.msra.mxu0 0
      %1564 = vmatprep.subr.bf16.mxu0 0
      %1565 = vmatpush1.bf16.msra.mxu0 0
      %1566 = vmatprep.subr.bf16.mxu0 0
      %1567 = vmatpush1.bf16.msra.mxu0 0
      %1568 = vmatprep.subr.bf16.mxu0 0
      %1569 = vmatpush1.bf16.msra.mxu0 0
      %1570 = vmatprep.subr.bf16.mxu0 0
      %1571 = vmatpush1.bf16.msra.mxu0 0
      %1572 = vmatprep.subr.bf16.mxu0 0
      %1573 = vmatpush1.bf16.msra.mxu0 0
      %1574 = vmatprep.subr.bf16.mxu0 0
      %1575 = vmatpush1.bf16.msra.mxu0 %v1556
      %1576 = vmatprep.subr.bf16.mxu0 0
      %1577 = vmatpush1.bf16.msra.mxu0 %v1555
      %1578 = vmatprep.subr.bf16.mxu0 0
      %1579 = vmatpush2.bf16.msra.mxu0 0
      %1580 = vmatprep.subr.bf16.mxu0 0
      %1581 = vmatpush2.bf16.msra.mxu0 0
      %1582 = vmatprep.subr.bf16.mxu0 0
      %1583 = vmatpush2.bf16.msra.mxu0 0
      %1584 = vmatprep.subr.bf16.mxu0 0
      %1585 = vmatpush2.bf16.msra.mxu0 0
      %1586 = vmatprep.subr.bf16.mxu0 0
      %1587 = vmatpush2.bf16.msra.mxu0 0
      %1588 = vmatprep.subr.bf16.mxu0 0
      %1589 = vmatpush2.bf16.msra.mxu0 0
      %1590 = vmatprep.subr.bf16.mxu0 0
      %1591 = vmatpush2.bf16.msra.mxu0 0
      %1592 = vmatprep.subr.bf16.mxu0 0
      %1593 = vmatpush2.bf16.msra.mxu0 0
      %1594 = vmatprep.mubr.bf16.mxu0 0
      %1595 = vmatmul.mubr.bf16.gmra.mxu0 %v1560
      %v1596 = vpop.f32.mrf.mxu0
      %v1597 = vadd.f32 %v1540, %v1596
      %v1598 = vpop.f32.mrf.mxu0
      %v1599 = vpop.f32.mrf.mxu0
      %v1600 = vadd.f32 %v1540, %v1599
      %v1601 = vpop.f32.mrf.mxu0
      %1602 = vdwg.mxu0
      %v1603 = vmul.f32 %v1597, 0.5
      %v1604 = vmul.f32 %v1600, 0.5
      %v1605 = vmul.f32 %v1597, 0.044715
      %v1606 = vmul.f32 %v1600, 0.044715
      %v1607 = vmul.f32 %v1605, %v1597
      %v1608 = vmul.f32 %v1606, %v1600
      %v1609 = vmul.f32 %v1607, %v1597
      %v1610 = vmul.f32 %v1608, %v1600
      %v1611 = vadd.f32 %v1597, %v1609
      %v1612 = vadd.f32 %v1600, %v1610
      %v1613 = vmul.f32 %v1611, 0.7978846
      %v1614 = vmul.f32 %v1612, 0.7978846
      %v1615 = vtanh.pop %v1613
      %v1616 = vtanh.pop %v1614
      %v1617 = vadd.f32 %v1615, 1.0
      %v1618 = vadd.f32 %v1616, 1.0
      %v1619 = vmul.f32 %v1603, %v1617
      %v1620 = vmul.f32 %v1604, %v1618
      %v1621 = vpack.c.bf16 %v1619, %v1619
      %v1622 = vpack.c.bf16 %v1620, %v1620
      %v1623 = vld [vmem:[%s641] sm:$0xf]
      %v1624 = vld [vmem:[%s641 + $0x4] sm:$0xf]
      %v1625 = vld [vmem:[%s641 + $0x8] sm:$0xf]
      %v1626 = vld [vmem:[%s641 + $0xc] sm:$0xf]
      %v1627 = vld [vmem:[%s641 + $0x10] sm:$0xf]
      %v1628 = vld [vmem:[%s641 + $0x14] sm:$0xf]
      %v1629 = vld [vmem:[%s641 + $0x18] sm:$0xf]
      %v1630 = vld [vmem:[%s641 + $0x1c] sm:$0xf]
      %v1631 = vld [vmem:[%s641 + $0x20] sm:$0xf]
      %v1632 = vld [vmem:[%s641 + $0x24] sm:$0xf]
      %v1633 = vld [vmem:[%s641 + $0x28] sm:$0xf]
      %v1634 = vld [vmem:[%s641 + $0x2c] sm:$0xf]
      %v1635 = vld [vmem:[%s641 + $0x30] sm:$0xf]
      %v1636 = vld [vmem:[%s641 + $0x34] sm:$0xf]
      %v1637 = vld [vmem:[%s641 + $0x38] sm:$0xf]
      %v1638 = vld [vmem:[%s641 + $0x3c] sm:$0xf]
      %v1639 = vld [vmem:[%s644] sm:$0x1]
      %v1641 = vlaneseq
      %v1642 = vshrl.u32 %v1641, 7
      %v1643 = vsub.s32 0, %v1642
      %v1644 = vrot.slane %v1639, %v1643
      %v1648 = vunpack.c.l.b16 %v1621
      %v1649 = vunpack.c.l.b16 %v1622
      %v1650 = vpack.c.b16 %v1649, %v1648
      %v1668 = vunpack.c.l.b16 %v1623
      %v1669 = vunpack.c.l.b16 %v1624
      %v1670 = vunpack.c.l.b16 %v1625
      %v1671 = vunpack.c.l.b16 %v1626
      %v1672 = vunpack.c.l.b16 %v1627
      %v1673 = vunpack.c.l.b16 %v1628
      %v1674 = vunpack.c.l.b16 %v1629
      %v1675 = vunpack.c.l.b16 %v1630
      %v1676 = vunpack.c.l.b16 %v1631
      %v1677 = vunpack.c.l.b16 %v1632
      %v1678 = vunpack.c.l.b16 %v1633
      %v1679 = vunpack.c.l.b16 %v1634
      %v1680 = vunpack.c.l.b16 %v1635
      %v1681 = vunpack.c.l.b16 %v1636
      %v1682 = vunpack.c.l.b16 %v1637
      %v1683 = vunpack.c.l.b16 %v1638
      %v1684 = vpack.c.b16 %v1669, %v1668
      %v1685 = vpack.c.b16 %v1671, %v1670
      %v1686 = vpack.c.b16 %v1673, %v1672
      %v1687 = vpack.c.b16 %v1675, %v1674
      %v1688 = vpack.c.b16 %v1677, %v1676
      %v1689 = vpack.c.b16 %v1679, %v1678
      %v1690 = vpack.c.b16 %v1681, %v1680
      %v1691 = vpack.c.b16 %v1683, %v1682
      %1700 = vmatprep.subr.bf16.mxu0 0
      %1701 = vmatpush1.bf16.msra.mxu0 %v1691
      %1702 = vmatprep.subr.bf16.mxu0 0
      %1703 = vmatpush1.bf16.msra.mxu0 %v1690
      %1704 = vmatprep.subr.bf16.mxu0 0
      %1705 = vmatpush1.bf16.msra.mxu0 %v1689
      %1706 = vmatprep.subr.bf16.mxu0 0
      %1707 = vmatpush1.bf16.msra.mxu0 %v1688
      %1708 = vmatprep.subr.bf16.mxu0 0
      %1709 = vmatpush1.bf16.msra.mxu0 %v1687
      %1710 = vmatprep.subr.bf16.mxu0 0
      %1711 = vmatpush1.bf16.msra.mxu0 %v1686
      %1712 = vmatprep.subr.bf16.mxu0 0
      %1713 = vmatpush1.bf16.msra.mxu0 %v1685
      %1714 = vmatprep.subr.bf16.mxu0 0
      %1715 = vmatpush1.bf16.msra.mxu0 %v1684
      %1716 = vmatprep.subr.bf16.mxu0 0
      %1717 = vmatpush2.bf16.msra.mxu0 0
      %1718 = vmatprep.subr.bf16.mxu0 0
      %1719 = vmatpush2.bf16.msra.mxu0 0
      %1720 = vmatprep.subr.bf16.mxu0 0
      %1721 = vmatpush2.bf16.msra.mxu0 0
      %1722 = vmatprep.subr.bf16.mxu0 0
      %1723 = vmatpush2.bf16.msra.mxu0 0
      %1724 = vmatprep.subr.bf16.mxu0 0
      %1725 = vmatpush2.bf16.msra.mxu0 0
      %1726 = vmatprep.subr.bf16.mxu0 0
      %1727 = vmatpush2.bf16.msra.mxu0 0
      %1728 = vmatprep.subr.bf16.mxu0 0
      %1729 = vmatpush2.bf16.msra.mxu0 0
      %1730 = vmatprep.subr.bf16.mxu0 0
      %1731 = vmatpush2.bf16.msra.mxu0 0
      %1732 = vmatprep.mubr.bf16.mxu0 0
      %1733 = vmatmul.mubr.bf16.gmra.mxu0 %v1650
      %v1734 = vpop.f32.mrf.mxu0
      %v1735 = vadd.f32 %v1644, %v1734
      %v1736 = vpop.f32.mrf.mxu0
      %v1737 = vpop.f32.mrf.mxu0
      %v1738 = vadd.f32 %v1644, %v1737
      %v1739 = vpop.f32.mrf.mxu0
      %1740 = vdwg.mxu0
      %v1741 = vadd.f32 %v1483, %v1735
      %v1742 = vadd.f32 %v1484, %v1738
      %1743 = vst.msk [vmem:[#allocation2] sm:$0xff] %vm665, %v1741
      %1744 = vst.msk [vmem:[#allocation2 + $0x8] sm:$0xff] %vm665, %v1742
      %p1745 = scmp.eq.s32.totalorder %s29, 1
      // Predicated region
      $region77: #{reward_model_forward.2} parent=71 // pred_check
        %p1746 = pneg %p1745
      $region78: #{reward_model_forward.2} parent=71 // pred_check_branch
        %1748 = sbr.rel (%p1746) target = $region80
      $region79: #{reward_model_forward.2} parent=71 // pred_region
        %1749 = vst.msk [vmem:[%s649] sm:$0xff] %vm665, %v1741
        %1750 = vst.msk [vmem:[%s649 + $0x8] sm:$0xff] %vm665, %v1742
      $region80: #{reward_model_forward.2} parent=71 // pred_fallthru
        _
      %s1751 = smul.u32 2, %s28
      %p1752 = scmp.lt.s32.totalorder %s1751, 1
      %s1753 = scalar_select %p1752, %s1751, 1
      %s1754 = smul.addr %s1753, 8
      %s1755 = scalar_lea.vmem %s13, %s1754
      // Predicated region
      $region81: #{reward_model_forward.2} parent=71 // pred_check
        %p1756 = pneg %p392
      $region82: #{reward_model_forward.2} parent=71 // pred_check_branch
        %1758 = sbr.rel (%p1756) target = $region84
      $region83: #{reward_model_forward.2} parent=71 // pred_region
        %s1759 = smul.u32 2, %s28
      $region84: #{reward_model_forward.2} parent=71 // pred_fallthru
        _
      // Predicated region
      $region85: #{reward_model_forward.2} parent=71 // pred_check
        %p1760 = pneg %p392
      $region86: #{reward_model_forward.2} parent=71 // pred_check_branch
        %1762 = sbr.rel (%p1760) target = $region88
      $region87: #{reward_model_forward.2} parent=71 // pred_region
        %s1763 = smul.u32 2, %s28
        %p1764 = scmp.lt.s32.totalorder %s1763, 1
        %s1765 = scalar_select %p1764, %s1763, 1
        %s1766 = smul.addr %s1765, 8
        %s1767 = scalar_lea.vmem %s13, %s1766
      $region88: #{reward_model_forward.2} parent=71 // pred_fallthru
        _
    $region72: #{reward_model_forward.2} parent=5 // pred_fallthru
      _
    %p1768 = scmp.le.s32.totalorder 2, %s19
    // Predicated region
    $region89: #{reward_model_forward.2} parent=5 // pred_check
      %p1769 = pneg %p1768
    $region90: #{reward_model_forward.2} parent=5 // pred_check_branch
      %1771 = sbr.rel (%p1769) target = $region92
    $region91: #{reward_model_forward.2} parent=5 // pred_region
      %s1772 = ssub.s32 %s19, 2
    $region92: #{reward_model_forward.2} parent=5 // pred_fallthru
      _
  $region6: #{reward_model_forward.2} parent=0 // loop_footer
    %s23 = sadd.s32 1, %s19
  $region7: #{reward_model_forward.2} parent=0 // loop_footer_branch
    %18 = sbr.rel target = $region3
  $region8: #{reward_model_forward.2} parent=0 // loop_exit
    _

</llo_original>
